<compile_context>
chip_gen: v7x
topology: tpu7x:2x2x1
jax: 0.10.0
libtpu: 0.0.40
codegen_flags: <defaults>
</compile_context>

<pallas_src>
import math

import jax
import jax.numpy as jnp
from jax.experimental import pallas as pl
from jax.experimental.pallas import tpu as pltpu

# ----- small, module-consistent hyper-parameters ----------------------------------------------
RNN_SIZE = 32      # rnn_size (== input_size of the core, per LSTM_ATTEN_LAYER.__init__)
ATT_SIZE = 8       # att_feats.size(1) == number of unrolled timesteps
BATCH = 8          # fills the 8 sublanes of a vreg row


# ==============================================================================================
# Fused Pallas kernel: full T-step LSTM recurrence, resident weights, hoisted i2h projection
# ==============================================================================================
def _lstm_atten_kernel(fc_ref, att_ref, wi_ref, wh_ref, b_ref, h_ref):
    """fc_ref: (B, R); att_ref: (B, T, R); wi_ref/wh_ref: (R, 4R); b_ref: (1, 4R);
    h_ref: (B, T, R) output hidden states."""
    B, R = fc_ref.shape
    T = att_ref.shape[1]
    N4 = 4 * R

    # h2h weight loaded once, stays in vregs/VMEM for the whole recurrence.
    wh = wh_ref[...]

    # ---- Hoisted input projection + bias: one M=B*T MXU push, done once ----------------------
    # (B, T, R) -> (B*T, R) is a tile-aligned major-dim merge (T == 8 sublanes).
    x2d = att_ref[...].reshape(B * T, R)
    pre = (jnp.dot(x2d, wi_ref[...], preferred_element_type=jnp.float32)
           + b_ref[...]).reshape(B, T, N4)                                   # (B, T, 4R)

    # ---- Hoisted per-lane gate-activation constants (computed once, reused each step) --------
    # Lanes [0, 3R): sigmoid gates;  lanes [3R, 4R): tanh candidate.
    # sigmoid(x) = 0.5 * (1 + tanh(0.5 * x))  -> one EUP tanh covers all four gates.
    lane = jax.lax.broadcasted_iota(jnp.int32, (B, N4), 1)
    is_sig = lane < 3 * R
    half_or_one = jnp.where(is_sig, 0.5, 1.0).astype(jnp.float32)            # (B, 4R)
    post_bias = jnp.where(is_sig, 0.5, 0.0).astype(jnp.float32)              # (B, 4R)

    prev_h = fc_ref[...]
    prev_c = fc_ref[...]

    # T is a small static constant -> fully unrolled; per-step serial work is just the
    # h2h matmul, one tanh EUP pass for the gates, one for tanh(next_c), and VPU math.
    for t in range(T):
        sums = pre[:, t, :] + jnp.dot(prev_h, wh,
                                      preferred_element_type=jnp.float32)    # (B, 4R)
        act = jnp.tanh(sums * half_or_one) * half_or_one + post_bias         # (B, 4R)
        in_gate = act[:, 0:R]
        forget_gate = act[:, R:2 * R]
        out_gate = act[:, 2 * R:3 * R]
        in_transform = act[:, 3 * R:4 * R]
        next_c = forget_gate * prev_c + in_gate * in_transform
        next_h = out_gate * jnp.tanh(next_c)
        h_ref[:, t, :] = next_h                                              # static store
        prev_h = next_h
        prev_c = next_c


def lstm_atten_layer(fc_feats, att_feats, wi_t, wh_t, b):
    """fc_feats: (B, R); att_feats: (B, T, R); wi_t/wh_t: (R, 4R) pre-transposed;
    b: (1, 4R) = bias_i2h + bias_h2h.  Returns h: (B, T, R)."""
    B, R = fc_feats.shape
    T = att_feats.shape[1]

    vmem_spec = pl.BlockSpec(memory_space=pltpu.MemorySpace.VMEM)
    return pl.pallas_call(
        _lstm_atten_kernel,
        out_shape=jax.ShapeDtypeStruct((B, T, R), jnp.float32),
        in_specs=[vmem_spec, vmem_spec, vmem_spec, vmem_spec, vmem_spec],
        out_specs=vmem_spec,
    )(fc_feats, att_feats, wi_t, wh_t, b)


# ==============================================================================================
# Parameter init (torch nn.Linear default: U(-1/sqrt(fan_in), 1/sqrt(fan_in))) + prep
# ==============================================================================================
def init_params(key, rnn_size):
    k1, k2, k3, k4 = jax.random.split(key, 4)
    bound = 1.0 / math.sqrt(rnn_size)
    wi = jax.random.uniform(k1, (4 * rnn_size, rnn_size), jnp.float32, -bound, bound)
    bi = jax.random.uniform(k2, (4 * rnn_size,), jnp.float32, -bound, bound)
    wh = jax.random.uniform(k3, (4 * rnn_size, rnn_size), jnp.float32, -bound, bound)
    bh = jax.random.uniform(k4, (4 * rnn_size,), jnp.float32, -bound, bound)
    return wi, bi, wh, bh


def prep_params(wi, bi, wh, bh):
    """One-time hoist: pre-transpose to (K, N) layout, merge the two biases."""
    return wi.T, wh.T, (bi + bh).reshape(1, -1)


# ==============================================================================================
# Pure-JAX reference (mirrors the intended torch forward) for a correctness check
# ==============================================================================================
def ref_forward(fc_feats, att_feats, wi, bi, wh, bh):
    B, R = fc_feats.shape
    T = att_feats.shape[1]
    prev_h = fc_feats
    prev_c = fc_feats
    hs = []
    hp = jax.lax.Precision.HIGHEST
    for t in range(T):
        xt = att_feats[:, t, :]
        sums = jnp.dot(xt, wi.T, precision=hp) + bi + jnp.dot(prev_h, wh.T, precision=hp) + bh
        i = jax.nn.sigmoid(sums[:, 0:R])
        f = jax.nn.sigmoid(sums[:, R:2 * R])
        o = jax.nn.sigmoid(sums[:, 2 * R:3 * R])
        g = jnp.tanh(sums[:, 3 * R:4 * R])
        prev_c = f * prev_c + i * g
        prev_h = o * jnp.tanh(prev_c)
        hs.append(prev_h)
    return jnp.stack(hs, axis=1)


if __name__ == "__main__":
    key = jax.random.PRNGKey(0)
    kp, kx, ka = jax.random.split(key, 3)

    wi, bi, wh, bh = init_params(kp, RNN_SIZE)
    wi_t, wh_t, b = prep_params(wi, bi, wh, bh)          # hoisted out of the forward path

    fc_feats = jax.random.normal(kx, (BATCH, RNN_SIZE), jnp.float32)
    att_feats = jax.random.normal(ka, (BATCH, ATT_SIZE, RNN_SIZE), jnp.float32)

    fwd = jax.jit(lstm_atten_layer)
    h = fwd(fc_feats, att_feats, wi_t, wh_t, b)
    jax.block_until_ready(h)

    assert h.shape == (BATCH, ATT_SIZE, RNN_SIZE)

    h_ref = ref_forward(fc_feats, att_feats, wi, bi, wh, bh)
    assert jnp.allclose(h, h_ref, rtol=1e-3, atol=1e-3), (
        f"max abs err {float(jnp.max(jnp.abs(h - h_ref)))}")

    print("KERNEL_OK")
</pallas_src>

<mosaic_0001>
module attributes {stable_mosaic.version = 11 : i64} {
  func.func @_lstm_atten_kernel(%arg0: memref<8x32xf32, #tpu.memory_space<vmem>>, %arg1: memref<8x8x32xf32, #tpu.memory_space<vmem>>, %arg2: memref<32x128xf32, #tpu.memory_space<vmem>>, %arg3: memref<32x128xf32, #tpu.memory_space<vmem>>, %arg4: memref<1x128xf32, #tpu.memory_space<vmem>>, %arg5: memref<8x8x32xf32, #tpu.memory_space<vmem>>) attributes {dimension_semantics = [], scalar_prefetch = 0 : i64, scratch_operands = 0 : i64, tpu.core_type = #tpu.core_type<tc>} {
    %c0 = arith.constant 0 : index
    %c0_0 = arith.constant 0 : index
    %0 = vector.load %arg3[%c0, %c0_0] : memref<32x128xf32, #tpu.memory_space<vmem>>, vector<32x128xf32>
    %c0_1 = arith.constant 0 : index
    %c0_2 = arith.constant 0 : index
    %c0_3 = arith.constant 0 : index
    %1 = vector.load %arg1[%c0_1, %c0_2, %c0_3] : memref<8x8x32xf32, #tpu.memory_space<vmem>>, vector<8x8x32xf32>
    %2 = vector.shape_cast %1 : vector<8x8x32xf32> to vector<64x32xf32>
    %c0_4 = arith.constant 0 : index
    %c0_5 = arith.constant 0 : index
    %3 = vector.load %arg2[%c0_4, %c0_5] : memref<32x128xf32, #tpu.memory_space<vmem>>, vector<32x128xf32>
    %cst = arith.constant dense<0.000000e+00> : vector<64x128xf32>
    %4 = tpu.matmul %2, %3, %cst {dimension_numbers = #tpu.dot_dimension_numbers<[1], [0], [0], [1], [0, 0, 1, 1], [], []>} : vector<64x32xf32>, vector<32x128xf32>, vector<64x128xf32> -> vector<64x128xf32>
    %c0_6 = arith.constant 0 : index
    %c0_7 = arith.constant 0 : index
    %5 = vector.load %arg4[%c0_6, %c0_7] : memref<1x128xf32, #tpu.memory_space<vmem>>, vector<1x128xf32>
    %6 = vector.broadcast %5 : vector<1x128xf32> to vector<64x128xf32>
    %7 = arith.addf %4, %6 : vector<64x128xf32>
    %8 = vector.shape_cast %7 : vector<64x128xf32> to vector<8x8x128xf32>
    %9 = tpu.iota {dimensions = array<i32: 1>} : vector<8x128xi32>
    %c96_i32 = arith.constant 96 : i32
    %10 = vector.broadcast %c96_i32 : i32 to vector<8x128xi32>
    %11 = arith.cmpi slt, %9, %10 : vector<8x128xi32>
    %cst_8 = arith.constant 5.000000e-01 : f32
    %cst_9 = arith.constant 1.000000e+00 : f32
    %12 = vector.broadcast %cst_8 : f32 to vector<8x128xf32>
    %13 = vector.broadcast %cst_9 : f32 to vector<8x128xf32>
    %14 = arith.select %11, %12, %13 : vector<8x128xi1>, vector<8x128xf32>
    %cst_10 = arith.constant 5.000000e-01 : f32
    %cst_11 = arith.constant 0.000000e+00 : f32
    %15 = vector.broadcast %cst_10 : f32 to vector<8x128xf32>
    %16 = vector.broadcast %cst_11 : f32 to vector<8x128xf32>
    %17 = arith.select %11, %15, %16 : vector<8x128xi1>, vector<8x128xf32>
    %c0_12 = arith.constant 0 : index
    %c0_13 = arith.constant 0 : index
    %18 = vector.load %arg0[%c0_12, %c0_13] : memref<8x32xf32, #tpu.memory_space<vmem>>, vector<8x32xf32>
    %c0_14 = arith.constant 0 : index
    %c0_15 = arith.constant 0 : index
    %19 = vector.load %arg0[%c0_14, %c0_15] : memref<8x32xf32, #tpu.memory_space<vmem>>, vector<8x32xf32>
    %20 = vector.extract_strided_slice %8 {offsets = [0, 0, 0], sizes = [8, 1, 128], strides = [1, 1, 1]} : vector<8x8x128xf32> to vector<8x1x128xf32>
    %21 = vector.shape_cast %20 : vector<8x1x128xf32> to vector<8x128xf32>
    %cst_16 = arith.constant dense<0.000000e+00> : vector<8x128xf32>
    %22 = tpu.matmul %18, %0, %cst_16 {dimension_numbers = #tpu.dot_dimension_numbers<[1], [0], [0], [1], [0, 0, 1, 1], [], []>} : vector<8x32xf32>, vector<32x128xf32>, vector<8x128xf32> -> vector<8x128xf32>
    %23 = arith.addf %21, %22 : vector<8x128xf32>
    %24 = arith.mulf %23, %14 : vector<8x128xf32>
    %25 = math.tanh %24 : vector<8x128xf32>
    %26 = arith.mulf %25, %14 : vector<8x128xf32>
    %27 = arith.addf %26, %17 : vector<8x128xf32>
    %28 = vector.extract_strided_slice %27 {offsets = [0, 0], sizes = [8, 32], strides = [1, 1]} : vector<8x128xf32> to vector<8x32xf32>
    %29 = vector.extract_strided_slice %27 {offsets = [0, 32], sizes = [8, 32], strides = [1, 1]} : vector<8x128xf32> to vector<8x32xf32>
    %30 = vector.extract_strided_slice %27 {offsets = [0, 64], sizes = [8, 32], strides = [1, 1]} : vector<8x128xf32> to vector<8x32xf32>
    %31 = vector.extract_strided_slice %27 {offsets = [0, 96], sizes = [8, 32], strides = [1, 1]} : vector<8x128xf32> to vector<8x32xf32>
    %32 = arith.mulf %29, %19 : vector<8x32xf32>
    %33 = arith.mulf %28, %31 : vector<8x32xf32>
    %34 = arith.addf %32, %33 : vector<8x32xf32>
    %35 = math.tanh %34 : vector<8x32xf32>
    %36 = arith.mulf %30, %35 : vector<8x32xf32>
    %c0_17 = arith.constant 0 : index
    %c0_18 = arith.constant 0 : index
    %c0_19 = arith.constant 0 : index
    %37 = vector.load %arg5[%c0_17, %c0_18, %c0_19] : memref<8x8x32xf32, #tpu.memory_space<vmem>>, vector<8x1x32xf32>
    %38 = vector.shape_cast %37 : vector<8x1x32xf32> to vector<8x32xf32>
    %39 = vector.shape_cast %36 : vector<8x32xf32> to vector<8x1x32xf32>
    tpu.vector_store %arg5[%c0_17, %c0_18, %c0_19], %39 {strides = array<i32>} : memref<8x8x32xf32, #tpu.memory_space<vmem>>, vector<8x1x32xf32>,
    %40 = vector.extract_strided_slice %8 {offsets = [0, 1, 0], sizes = [8, 1, 128], strides = [1, 1, 1]} : vector<8x8x128xf32> to vector<8x1x128xf32>
    %41 = vector.shape_cast %40 : vector<8x1x128xf32> to vector<8x128xf32>
    %cst_20 = arith.constant dense<0.000000e+00> : vector<8x128xf32>
    %42 = tpu.matmul %36, %0, %cst_20 {dimension_numbers = #tpu.dot_dimension_numbers<[1], [0], [0], [1], [0, 0, 1, 1], [], []>} : vector<8x32xf32>, vector<32x128xf32>, vector<8x128xf32> -> vector<8x128xf32>
    %43 = arith.addf %41, %42 : vector<8x128xf32>
    %44 = arith.mulf %43, %14 : vector<8x128xf32>
    %45 = math.tanh %44 : vector<8x128xf32>
    %46 = arith.mulf %45, %14 : vector<8x128xf32>
    %47 = arith.addf %46, %17 : vector<8x128xf32>
    %48 = vector.extract_strided_slice %47 {offsets = [0, 0], sizes = [8, 32], strides = [1, 1]} : vector<8x128xf32> to vector<8x32xf32>
    %49 = vector.extract_strided_slice %47 {offsets = [0, 32], sizes = [8, 32], strides = [1, 1]} : vector<8x128xf32> to vector<8x32xf32>
    %50 = vector.extract_strided_slice %47 {offsets = [0, 64], sizes = [8, 32], strides = [1, 1]} : vector<8x128xf32> to vector<8x32xf32>
    %51 = vector.extract_strided_slice %47 {offsets = [0, 96], sizes = [8, 32], strides = [1, 1]} : vector<8x128xf32> to vector<8x32xf32>
    %52 = arith.mulf %49, %34 : vector<8x32xf32>
    %53 = arith.mulf %48, %51 : vector<8x32xf32>
    %54 = arith.addf %52, %53 : vector<8x32xf32>
    %55 = math.tanh %54 : vector<8x32xf32>
    %56 = arith.mulf %50, %55 : vector<8x32xf32>
    %c0_21 = arith.constant 0 : index
    %c1 = arith.constant 1 : index
    %c0_22 = arith.constant 0 : index
    %57 = vector.load %arg5[%c0_21, %c1, %c0_22] : memref<8x8x32xf32, #tpu.memory_space<vmem>>, vector<8x1x32xf32>
    %58 = vector.shape_cast %57 : vector<8x1x32xf32> to vector<8x32xf32>
    %59 = vector.shape_cast %56 : vector<8x32xf32> to vector<8x1x32xf32>
    tpu.vector_store %arg5[%c0_21, %c1, %c0_22], %59 {strides = array<i32>} : memref<8x8x32xf32, #tpu.memory_space<vmem>>, vector<8x1x32xf32>,
    %60 = vector.extract_strided_slice %8 {offsets = [0, 2, 0], sizes = [8, 1, 128], strides = [1, 1, 1]} : vector<8x8x128xf32> to vector<8x1x128xf32>
    %61 = vector.shape_cast %60 : vector<8x1x128xf32> to vector<8x128xf32>
    %cst_23 = arith.constant dense<0.000000e+00> : vector<8x128xf32>
    %62 = tpu.matmul %56, %0, %cst_23 {dimension_numbers = #tpu.dot_dimension_numbers<[1], [0], [0], [1], [0, 0, 1, 1], [], []>} : vector<8x32xf32>, vector<32x128xf32>, vector<8x128xf32> -> vector<8x128xf32>
    %63 = arith.addf %61, %62 : vector<8x128xf32>
    %64 = arith.mulf %63, %14 : vector<8x128xf32>
    %65 = math.tanh %64 : vector<8x128xf32>
    %66 = arith.mulf %65, %14 : vector<8x128xf32>
    %67 = arith.addf %66, %17 : vector<8x128xf32>
    %68 = vector.extract_strided_slice %67 {offsets = [0, 0], sizes = [8, 32], strides = [1, 1]} : vector<8x128xf32> to vector<8x32xf32>
    %69 = vector.extract_strided_slice %67 {offsets = [0, 32], sizes = [8, 32], strides = [1, 1]} : vector<8x128xf32> to vector<8x32xf32>
    %70 = vector.extract_strided_slice %67 {offsets = [0, 64], sizes = [8, 32], strides = [1, 1]} : vector<8x128xf32> to vector<8x32xf32>
    %71 = vector.extract_strided_slice %67 {offsets = [0, 96], sizes = [8, 32], strides = [1, 1]} : vector<8x128xf32> to vector<8x32xf32>
    %72 = arith.mulf %69, %54 : vector<8x32xf32>
    %73 = arith.mulf %68, %71 : vector<8x32xf32>
    %74 = arith.addf %72, %73 : vector<8x32xf32>
    %75 = math.tanh %74 : vector<8x32xf32>
    %76 = arith.mulf %70, %75 : vector<8x32xf32>
    %c0_24 = arith.constant 0 : index
    %c2 = arith.constant 2 : index
    %c0_25 = arith.constant 0 : index
    %77 = vector.load %arg5[%c0_24, %c2, %c0_25] : memref<8x8x32xf32, #tpu.memory_space<vmem>>, vector<8x1x32xf32>
    %78 = vector.shape_cast %77 : vector<8x1x32xf32> to vector<8x32xf32>
    %79 = vector.shape_cast %76 : vector<8x32xf32> to vector<8x1x32xf32>
    tpu.vector_store %arg5[%c0_24, %c2, %c0_25], %79 {strides = array<i32>} : memref<8x8x32xf32, #tpu.memory_space<vmem>>, vector<8x1x32xf32>,
    %80 = vector.extract_strided_slice %8 {offsets = [0, 3, 0], sizes = [8, 1, 128], strides = [1, 1, 1]} : vector<8x8x128xf32> to vector<8x1x128xf32>
    %81 = vector.shape_cast %80 : vector<8x1x128xf32> to vector<8x128xf32>
    %cst_26 = arith.constant dense<0.000000e+00> : vector<8x128xf32>
    %82 = tpu.matmul %76, %0, %cst_26 {dimension_numbers = #tpu.dot_dimension_numbers<[1], [0], [0], [1], [0, 0, 1, 1], [], []>} : vector<8x32xf32>, vector<32x128xf32>, vector<8x128xf32> -> vector<8x128xf32>
    %83 = arith.addf %81, %82 : vector<8x128xf32>
    %84 = arith.mulf %83, %14 : vector<8x128xf32>
    %85 = math.tanh %84 : vector<8x128xf32>
    %86 = arith.mulf %85, %14 : vector<8x128xf32>
    %87 = arith.addf %86, %17 : vector<8x128xf32>
    %88 = vector.extract_strided_slice %87 {offsets = [0, 0], sizes = [8, 32], strides = [1, 1]} : vector<8x128xf32> to vector<8x32xf32>
    %89 = vector.extract_strided_slice %87 {offsets = [0, 32], sizes = [8, 32], strides = [1, 1]} : vector<8x128xf32> to vector<8x32xf32>
    %90 = vector.extract_strided_slice %87 {offsets = [0, 64], sizes = [8, 32], strides = [1, 1]} : vector<8x128xf32> to vector<8x32xf32>
    %91 = vector.extract_strided_slice %87 {offsets = [0, 96], sizes = [8, 32], strides = [1, 1]} : vector<8x128xf32> to vector<8x32xf32>
    %92 = arith.mulf %89, %74 : vector<8x32xf32>
    %93 = arith.mulf %88, %91 : vector<8x32xf32>
    %94 = arith.addf %92, %93 : vector<8x32xf32>
    %95 = math.tanh %94 : vector<8x32xf32>
    %96 = arith.mulf %90, %95 : vector<8x32xf32>
    %c0_27 = arith.constant 0 : index
    %c3 = arith.constant 3 : index
    %c0_28 = arith.constant 0 : index
    %97 = vector.load %arg5[%c0_27, %c3, %c0_28] : memref<8x8x32xf32, #tpu.memory_space<vmem>>, vector<8x1x32xf32>
    %98 = vector.shape_cast %97 : vector<8x1x32xf32> to vector<8x32xf32>
    %99 = vector.shape_cast %96 : vector<8x32xf32> to vector<8x1x32xf32>
    tpu.vector_store %arg5[%c0_27, %c3, %c0_28], %99 {strides = array<i32>} : memref<8x8x32xf32, #tpu.memory_space<vmem>>, vector<8x1x32xf32>,
    %100 = vector.extract_strided_slice %8 {offsets = [0, 4, 0], sizes = [8, 1, 128], strides = [1, 1, 1]} : vector<8x8x128xf32> to vector<8x1x128xf32>
    %101 = vector.shape_cast %100 : vector<8x1x128xf32> to vector<8x128xf32>
    %cst_29 = arith.constant dense<0.000000e+00> : vector<8x128xf32>
    %102 = tpu.matmul %96, %0, %cst_29 {dimension_numbers = #tpu.dot_dimension_numbers<[1], [0], [0], [1], [0, 0, 1, 1], [], []>} : vector<8x32xf32>, vector<32x128xf32>, vector<8x128xf32> -> vector<8x128xf32>
    %103 = arith.addf %101, %102 : vector<8x128xf32>
    %104 = arith.mulf %103, %14 : vector<8x128xf32>
    %105 = math.tanh %104 : vector<8x128xf32>
    %106 = arith.mulf %105, %14 : vector<8x128xf32>
    %107 = arith.addf %106, %17 : vector<8x128xf32>
    %108 = vector.extract_strided_slice %107 {offsets = [0, 0], sizes = [8, 32], strides = [1, 1]} : vector<8x128xf32> to vector<8x32xf32>
    %109 = vector.extract_strided_slice %107 {offsets = [0, 32], sizes = [8, 32], strides = [1, 1]} : vector<8x128xf32> to vector<8x32xf32>
    %110 = vector.extract_strided_slice %107 {offsets = [0, 64], sizes = [8, 32], strides = [1, 1]} : vector<8x128xf32> to vector<8x32xf32>
    %111 = vector.extract_strided_slice %107 {offsets = [0, 96], sizes = [8, 32], strides = [1, 1]} : vector<8x128xf32> to vector<8x32xf32>
    %112 = arith.mulf %109, %94 : vector<8x32xf32>
    %113 = arith.mulf %108, %111 : vector<8x32xf32>
    %114 = arith.addf %112, %113 : vector<8x32xf32>
    %115 = math.tanh %114 : vector<8x32xf32>
    %116 = arith.mulf %110, %115 : vector<8x32xf32>
    %c0_30 = arith.constant 0 : index
    %c4 = arith.constant 4 : index
    %c0_31 = arith.constant 0 : index
    %117 = vector.load %arg5[%c0_30, %c4, %c0_31] : memref<8x8x32xf32, #tpu.memory_space<vmem>>, vector<8x1x32xf32>
    %118 = vector.shape_cast %117 : vector<8x1x32xf32> to vector<8x32xf32>
    %119 = vector.shape_cast %116 : vector<8x32xf32> to vector<8x1x32xf32>
    tpu.vector_store %arg5[%c0_30, %c4, %c0_31], %119 {strides = array<i32>} : memref<8x8x32xf32, #tpu.memory_space<vmem>>, vector<8x1x32xf32>,
    %120 = vector.extract_strided_slice %8 {offsets = [0, 5, 0], sizes = [8, 1, 128], strides = [1, 1, 1]} : vector<8x8x128xf32> to vector<8x1x128xf32>
    %121 = vector.shape_cast %120 : vector<8x1x128xf32> to vector<8x128xf32>
    %cst_32 = arith.constant dense<0.000000e+00> : vector<8x128xf32>
    %122 = tpu.matmul %116, %0, %cst_32 {dimension_numbers = #tpu.dot_dimension_numbers<[1], [0], [0], [1], [0, 0, 1, 1], [], []>} : vector<8x32xf32>, vector<32x128xf32>, vector<8x128xf32> -> vector<8x128xf32>
    %123 = arith.addf %121, %122 : vector<8x128xf32>
    %124 = arith.mulf %123, %14 : vector<8x128xf32>
    %125 = math.tanh %124 : vector<8x128xf32>
    %126 = arith.mulf %125, %14 : vector<8x128xf32>
    %127 = arith.addf %126, %17 : vector<8x128xf32>
    %128 = vector.extract_strided_slice %127 {offsets = [0, 0], sizes = [8, 32], strides = [1, 1]} : vector<8x128xf32> to vector<8x32xf32>
    %129 = vector.extract_strided_slice %127 {offsets = [0, 32], sizes = [8, 32], strides = [1, 1]} : vector<8x128xf32> to vector<8x32xf32>
    %130 = vector.extract_strided_slice %127 {offsets = [0, 64], sizes = [8, 32], strides = [1, 1]} : vector<8x128xf32> to vector<8x32xf32>
    %131 = vector.extract_strided_slice %127 {offsets = [0, 96], sizes = [8, 32], strides = [1, 1]} : vector<8x128xf32> to vector<8x32xf32>
    %132 = arith.mulf %129, %114 : vector<8x32xf32>
    %133 = arith.mulf %128, %131 : vector<8x32xf32>
    %134 = arith.addf %132, %133 : vector<8x32xf32>
    %135 = math.tanh %134 : vector<8x32xf32>
    %136 = arith.mulf %130, %135 : vector<8x32xf32>
    %c0_33 = arith.constant 0 : index
    %c5 = arith.constant 5 : index
    %c0_34 = arith.constant 0 : index
    %137 = vector.load %arg5[%c0_33, %c5, %c0_34] : memref<8x8x32xf32, #tpu.memory_space<vmem>>, vector<8x1x32xf32>
    %138 = vector.shape_cast %137 : vector<8x1x32xf32> to vector<8x32xf32>
    %139 = vector.shape_cast %136 : vector<8x32xf32> to vector<8x1x32xf32>
    tpu.vector_store %arg5[%c0_33, %c5, %c0_34], %139 {strides = array<i32>} : memref<8x8x32xf32, #tpu.memory_space<vmem>>, vector<8x1x32xf32>,
    %140 = vector.extract_strided_slice %8 {offsets = [0, 6, 0], sizes = [8, 1, 128], strides = [1, 1, 1]} : vector<8x8x128xf32> to vector<8x1x128xf32>
    %141 = vector.shape_cast %140 : vector<8x1x128xf32> to vector<8x128xf32>
    %cst_35 = arith.constant dense<0.000000e+00> : vector<8x128xf32>
    %142 = tpu.matmul %136, %0, %cst_35 {dimension_numbers = #tpu.dot_dimension_numbers<[1], [0], [0], [1], [0, 0, 1, 1], [], []>} : vector<8x32xf32>, vector<32x128xf32>, vector<8x128xf32> -> vector<8x128xf32>
    %143 = arith.addf %141, %142 : vector<8x128xf32>
    %144 = arith.mulf %143, %14 : vector<8x128xf32>
    %145 = math.tanh %144 : vector<8x128xf32>
    %146 = arith.mulf %145, %14 : vector<8x128xf32>
    %147 = arith.addf %146, %17 : vector<8x128xf32>
    %148 = vector.extract_strided_slice %147 {offsets = [0, 0], sizes = [8, 32], strides = [1, 1]} : vector<8x128xf32> to vector<8x32xf32>
    %149 = vector.extract_strided_slice %147 {offsets = [0, 32], sizes = [8, 32], strides = [1, 1]} : vector<8x128xf32> to vector<8x32xf32>
    %150 = vector.extract_strided_slice %147 {offsets = [0, 64], sizes = [8, 32], strides = [1, 1]} : vector<8x128xf32> to vector<8x32xf32>
    %151 = vector.extract_strided_slice %147 {offsets = [0, 96], sizes = [8, 32], strides = [1, 1]} : vector<8x128xf32> to vector<8x32xf32>
    %152 = arith.mulf %149, %134 : vector<8x32xf32>
    %153 = arith.mulf %148, %151 : vector<8x32xf32>
    %154 = arith.addf %152, %153 : vector<8x32xf32>
    %155 = math.tanh %154 : vector<8x32xf32>
    %156 = arith.mulf %150, %155 : vector<8x32xf32>
    %c0_36 = arith.constant 0 : index
    %c6 = arith.constant 6 : index
    %c0_37 = arith.constant 0 : index
    %157 = vector.load %arg5[%c0_36, %c6, %c0_37] : memref<8x8x32xf32, #tpu.memory_space<vmem>>, vector<8x1x32xf32>
    %158 = vector.shape_cast %157 : vector<8x1x32xf32> to vector<8x32xf32>
    %159 = vector.shape_cast %156 : vector<8x32xf32> to vector<8x1x32xf32>
    tpu.vector_store %arg5[%c0_36, %c6, %c0_37], %159 {strides = array<i32>} : memref<8x8x32xf32, #tpu.memory_space<vmem>>, vector<8x1x32xf32>,
    %160 = vector.extract_strided_slice %8 {offsets = [0, 7, 0], sizes = [8, 1, 128], strides = [1, 1, 1]} : vector<8x8x128xf32> to vector<8x1x128xf32>
    %161 = vector.shape_cast %160 : vector<8x1x128xf32> to vector<8x128xf32>
    %cst_38 = arith.constant dense<0.000000e+00> : vector<8x128xf32>
    %162 = tpu.matmul %156, %0, %cst_38 {dimension_numbers = #tpu.dot_dimension_numbers<[1], [0], [0], [1], [0, 0, 1, 1], [], []>} : vector<8x32xf32>, vector<32x128xf32>, vector<8x128xf32> -> vector<8x128xf32>
    %163 = arith.addf %161, %162 : vector<8x128xf32>
    %164 = arith.mulf %163, %14 : vector<8x128xf32>
    %165 = math.tanh %164 : vector<8x128xf32>
    %166 = arith.mulf %165, %14 : vector<8x128xf32>
    %167 = arith.addf %166, %17 : vector<8x128xf32>
    %168 = vector.extract_strided_slice %167 {offsets = [0, 0], sizes = [8, 32], strides = [1, 1]} : vector<8x128xf32> to vector<8x32xf32>
    %169 = vector.extract_strided_slice %167 {offsets = [0, 32], sizes = [8, 32], strides = [1, 1]} : vector<8x128xf32> to vector<8x32xf32>
    %170 = vector.extract_strided_slice %167 {offsets = [0, 64], sizes = [8, 32], strides = [1, 1]} : vector<8x128xf32> to vector<8x32xf32>
    %171 = vector.extract_strided_slice %167 {offsets = [0, 96], sizes = [8, 32], strides = [1, 1]} : vector<8x128xf32> to vector<8x32xf32>
    %172 = arith.mulf %169, %154 : vector<8x32xf32>
    %173 = arith.mulf %168, %171 : vector<8x32xf32>
    %174 = arith.addf %172, %173 : vector<8x32xf32>
    %175 = math.tanh %174 : vector<8x32xf32>
    %176 = arith.mulf %170, %175 : vector<8x32xf32>
    %c0_39 = arith.constant 0 : index
    %c7 = arith.constant 7 : index
    %c0_40 = arith.constant 0 : index
    %177 = vector.load %arg5[%c0_39, %c7, %c0_40] : memref<8x8x32xf32, #tpu.memory_space<vmem>>, vector<8x1x32xf32>
    %178 = vector.shape_cast %177 : vector<8x1x32xf32> to vector<8x32xf32>
    %179 = vector.shape_cast %176 : vector<8x32xf32> to vector<8x1x32xf32>
    tpu.vector_store %arg5[%c0_39, %c7, %c0_40], %179 {strides = array<i32>} : memref<8x8x32xf32, #tpu.memory_space<vmem>>, vector<8x1x32xf32>,
    return
  }
}

</mosaic_0001>

<llo_original>
// kernel: lstm_atten_layer.1
$region0: #{lstm_atten_layer.1}
  #allocation0 [shape = 'u32[]', space=smem, size = 0x4, offset = 0x4, fixed_abs, tag = 'smem constant byte address 0x4 - core index']
  #allocation1 [shape = 'u32[144,128]{1,0:T(1,128)}', space=vmem, size = 0x12000, scoped, tag = 'internal scratch']
  %s0 = inlined_call_operand.hbm [shape: f32[8,32], index: 0, kind: input, shape index: {}]
  %s1 = inlined_call_operand.hbm [shape: f32[8,8,32], index: 1, kind: input, shape index: {}]
  %s2 = inlined_call_operand.hbm [shape: f32[32,128], index: 2, kind: input, shape index: {}]
  %s3 = inlined_call_operand.hbm [shape: f32[32,128], index: 3, kind: input, shape index: {}]
  %s4 = inlined_call_operand.vmem [shape: f32[1,128], index: 4, kind: input, shape index: {}]
  %s5 = inlined_call_operand.hbm [shape: f32[8,8,32], index: 5, kind: output, shape index: {}]
  %s6 = sld [smem:[#allocation0]]
  $region46: #{lstm_atten_layer.1} parent=0
    _
  %s8 = ssub.s32 1, %s6
  %s9 = scalar_select 0, %s8, %s6
  $region1: #{lstm_atten_layer.1} parent=0
    #allocation2 [shape = 'u8[4096]{0}', space=vmem, size = 0x1000, scoped, tag = 'input window, operand 0, single buffered']
    #allocation3 [shape = 's32[1]{0}', space=sflag, size = 0x4, scoped, tag = 'scoped memory for lstm_atten_layer.1']
    #allocation4 [shape = 's32[1]{0}', space=sflag, size = 0x4, scoped, tag = 'scoped memory for lstm_atten_layer.1']
    #allocation5 [shape = 'u8[32768]{0}', space=vmem, size = 0x8000, scoped, tag = 'input window, operand 1, single buffered']
    #allocation6 [shape = 's32[1]{0}', space=sflag, size = 0x4, scoped, tag = 'scoped memory for lstm_atten_layer.1']
    #allocation7 [shape = 'u8[16384]{0}', space=vmem, size = 0x4000, scoped, tag = 'input window, operand 2, single buffered']
    #allocation8 [shape = 'u8[16384]{0}', space=vmem, size = 0x4000, scoped, tag = 'input window, operand 3, single buffered']
    #allocation9 [shape = 's32[1]{0}', space=sflag, size = 0x4, scoped, tag = 'scoped memory for lstm_atten_layer.1']
    #allocation10 [shape = 'u8[32768]{0}', space=vmem, size = 0x8000, scoped, tag = 'output window, operand 0, single buffered']
    %10 = vsyncpa [#allocation3], 0
    %11 = vsyncpa [#allocation6], 0
    %12 = vsyncpa [#allocation9], 0
    %13 = vsyncpa [#allocation4], 0
    // Predicated region
    $region2: #{lstm_atten_layer.1} parent=1 // pred_check
      _
    $region3: #{lstm_atten_layer.1} parent=1 // pred_check_branch
      %15 = sbr.rel (0) target = $region5
    $region4: #{lstm_atten_layer.1} parent=1 // pred_region
      %s17 = ssub.s32 128, 128
      %18 = vsyncadd [#allocation3], %s17
      %s20 = sshll.u32 [#allocation2], 4
      %s21 = int_to_ptr.vmem [resolvable:$true] %s20
      %23 = dma.hbm_to_vmem [thread:$0]  %s0, 128, %s21, [#allocation3]
    $region5: #{lstm_atten_layer.1} parent=1 // pred_fallthru
      _
    // Predicated region
    $region6: #{lstm_atten_layer.1} parent=1 // pred_check
      _
    $region7: #{lstm_atten_layer.1} parent=1 // pred_check_branch
      %25 = sbr.rel (0) target = $region9
    $region8: #{lstm_atten_layer.1} parent=1 // pred_region
      %s27 = ssub.s32 1024, 1024
      %28 = vsyncadd [#allocation6], %s27
      %s29 = sshll.u32 [#allocation5], 4
      %s30 = int_to_ptr.vmem [resolvable:$true] %s29
      %35 = dma.hbm_to_vmem [thread:$0]  %s1, 1024, %s30, [#allocation6], 128, 128, 8
    $region9: #{lstm_atten_layer.1} parent=1 // pred_fallthru
      _
    // Predicated region
    $region10: #{lstm_atten_layer.1} parent=1 // pred_check
      _
    $region11: #{lstm_atten_layer.1} parent=1 // pred_check_branch
      %37 = sbr.rel (0) target = $region13
    $region12: #{lstm_atten_layer.1} parent=1 // pred_region
      %s39 = ssub.s32 512, 512
      %40 = vsyncadd [#allocation6], %s39
      %s41 = sshll.u32 [#allocation7], 4
      %s42 = int_to_ptr.vmem [resolvable:$true] %s41
      %47 = dma.hbm_to_vmem [thread:$0]  %s2, 512, %s42, [#allocation6], 128, 128, 8
    $region13: #{lstm_atten_layer.1} parent=1 // pred_fallthru
      _
    // Predicated region
    $region14: #{lstm_atten_layer.1} parent=1 // pred_check
      _
    $region15: #{lstm_atten_layer.1} parent=1 // pred_check_branch
      %49 = sbr.rel (0) target = $region17
    $region16: #{lstm_atten_layer.1} parent=1 // pred_region
      %s51 = ssub.s32 512, 512
      %52 = vsyncadd [#allocation9], %s51
      %s53 = sshll.u32 [#allocation8], 4
      %s54 = int_to_ptr.vmem [resolvable:$true] %s53
      %59 = dma.hbm_to_vmem [thread:$0]  %s3, 512, %s54, [#allocation9], 128, 128, 8
    $region17: #{lstm_atten_layer.1} parent=1 // pred_fallthru
      _
    // Predicated region
    $region18: #{lstm_atten_layer.1} parent=1 // pred_check
      _
    $region19: #{lstm_atten_layer.1} parent=1 // pred_check_branch
      %61 = sbr.rel (0) target = $region21
    $region20: #{lstm_atten_layer.1} parent=1 // pred_region
      _
    $region21: #{lstm_atten_layer.1} parent=1 // pred_fallthru
      _
    // Predicated region
    $region22: #{lstm_atten_layer.1} parent=1 // pred_check
      _
    $region23: #{lstm_atten_layer.1} parent=1 // pred_check_branch
      %63 = sbr.rel (0) target = $region25
    $region24: #{lstm_atten_layer.1} parent=1 // pred_region
      %64 = dma.done [#allocation3], 128
    $region25: #{lstm_atten_layer.1} parent=1 // pred_fallthru
      _
    // Predicated region
    $region26: #{lstm_atten_layer.1} parent=1 // pred_check
      _
    $region27: #{lstm_atten_layer.1} parent=1 // pred_check_branch
      %66 = sbr.rel (0) target = $region29
    $region28: #{lstm_atten_layer.1} parent=1 // pred_region
      %67 = dma.done [#allocation6], 1024
    $region29: #{lstm_atten_layer.1} parent=1 // pred_fallthru
      _
    // Predicated region
    $region30: #{lstm_atten_layer.1} parent=1 // pred_check
      _
    $region31: #{lstm_atten_layer.1} parent=1 // pred_check_branch
      %69 = sbr.rel (0) target = $region33
    $region32: #{lstm_atten_layer.1} parent=1 // pred_region
      %70 = dma.done [#allocation6], 512
    $region33: #{lstm_atten_layer.1} parent=1 // pred_fallthru
      _
    // Predicated region
    $region34: #{lstm_atten_layer.1} parent=1 // pred_check
      _
    $region35: #{lstm_atten_layer.1} parent=1 // pred_check_branch
      %72 = sbr.rel (0) target = $region37
    $region36: #{lstm_atten_layer.1} parent=1 // pred_region
      %73 = dma.done [#allocation9], 512
    $region37: #{lstm_atten_layer.1} parent=1 // pred_fallthru
      _
    %v74 = vld [vmem:[#allocation8] sm:$0xff]
    %v75 = vld [vmem:[#allocation8 + $0x8] sm:$0xff]
    %v76 = vld [vmem:[#allocation8 + $0x10] sm:$0xff]
    %v77 = vld [vmem:[#allocation8 + $0x18] sm:$0xff]
    %v78 = vld [vmem:[#allocation5] sm:$0xff]
    %v79 = vld [vmem:[#allocation5 + $0x8] sm:$0xff]
    %v80 = vld [vmem:[#allocation5 + $0x10] sm:$0xff]
    %v81 = vld [vmem:[#allocation5 + $0x18] sm:$0xff]
    %v82 = vld [vmem:[#allocation5 + $0x20] sm:$0xff]
    %v83 = vld [vmem:[#allocation5 + $0x28] sm:$0xff]
    %v84 = vld [vmem:[#allocation5 + $0x30] sm:$0xff]
    %v85 = vld [vmem:[#allocation5 + $0x38] sm:$0xff]
    %v86 = vld [vmem:[#allocation7] sm:$0xff]
    %v87 = vld [vmem:[#allocation7 + $0x8] sm:$0xff]
    %v88 = vld [vmem:[#allocation7 + $0x10] sm:$0xff]
    %v89 = vld [vmem:[#allocation7 + $0x18] sm:$0xff]
    %v90 = vld [vmem:[%s4] sm:$0x1]
    %v92 = vlaneseq
    %v93 = vshrl.u32 %v92, 7
    %v94 = vsub.s32 0, %v93
    %v95 = vrot.slane %v90, %v94
    %vm97 = vcmask 261120
    %v99 = vsel %vm97, %v78, 0
    %v102 = vsel %vm97, %v79, 0
    %v105 = vsel %vm97, %v80, 0
    %v108 = vsel %vm97, %v81, 0
    %v111 = vsel %vm97, %v82, 0
    %v114 = vsel %vm97, %v83, 0
    %v117 = vsel %vm97, %v84, 0
    %v120 = vsel %vm97, %v85, 0
    %122 = vmatprep.subr.mxu0 0.0
    %123 = vmatpush1.msra.mxu0 %v86
    %124 = vmatprep.subr.mxu0 0.0
    %125 = vmatpush1.msra.mxu0 %v87
    %126 = vmatprep.subr.mxu0 0.0
    %127 = vmatpush1.msra.mxu0 %v88
    %128 = vmatprep.subr.mxu0 0.0
    %129 = vmatpush1.msra.mxu0 %v89
    %130 = vmatprep.subr.mxu0 0.0
    %131 = vmatpush1.msra.mxu0 0.0
    %132 = vmatprep.subr.mxu0 0.0
    %133 = vmatpush1.msra.mxu0 0.0
    %134 = vmatprep.subr.mxu0 0.0
    %135 = vmatpush1.msra.mxu0 0.0
    %136 = vmatprep.subr.mxu0 0.0
    %137 = vmatpush1.msra.mxu0 0.0
    %138 = vmatprep.subr.mxu0 0.0
    %139 = vmatpush1.msra.mxu0 0.0
    %140 = vmatprep.subr.mxu0 0.0
    %141 = vmatpush1.msra.mxu0 0.0
    %142 = vmatprep.subr.mxu0 0.0
    %143 = vmatpush1.msra.mxu0 0.0
    %144 = vmatprep.subr.mxu0 0.0
    %145 = vmatpush1.msra.mxu0 0.0
    %146 = vmatprep.subr.mxu0 0.0
    %147 = vmatpush1.msra.mxu0 0.0
    %148 = vmatprep.subr.mxu0 0.0
    %149 = vmatpush1.msra.mxu0 0.0
    %150 = vmatprep.subr.mxu0 0.0
    %151 = vmatpush1.msra.mxu0 0.0
    %152 = vmatprep.subr.mxu0 0.0
    %153 = vmatpush1.msra.mxu0 0.0
    %154 = vmatprep.subr.mxu0 0.0
    %155 = vmatpush1.msra.mxu0 0.0
    %156 = vmatprep.subr.mxu0 0.0
    %157 = vmatpush1.msra.mxu0 0.0
    %158 = vmatprep.subr.mxu0 0.0
    %159 = vmatpush1.msra.mxu0 0.0
    %160 = vmatprep.subr.mxu0 0.0
    %161 = vmatpush1.msra.mxu0 0.0
    %162 = vmatprep.subr.mxu0 0.0
    %163 = vmatpush1.msra.mxu0 0.0
    %164 = vmatprep.subr.mxu0 0.0
    %165 = vmatpush1.msra.mxu0 0.0
    %166 = vmatprep.subr.mxu0 0.0
    %167 = vmatpush1.msra.mxu0 0.0
    %168 = vmatprep.subr.mxu0 0.0
    %169 = vmatpush1.msra.mxu0 0.0
    %170 = vmatprep.subr.mxu0 0.0
    %171 = vmatpush1.msra.mxu0 0.0
    %172 = vmatprep.subr.mxu0 0.0
    %173 = vmatpush1.msra.mxu0 0.0
    %174 = vmatprep.subr.mxu0 0.0
    %175 = vmatpush1.msra.mxu0 0.0
    %176 = vmatprep.subr.mxu0 0.0
    %177 = vmatpush1.msra.mxu0 0.0
    %178 = vmatprep.subr.mxu0 0.0
    %179 = vmatpush1.msra.mxu0 0.0
    %180 = vmatprep.subr.mxu0 0.0
    %181 = vmatpush1.msra.mxu0 0.0
    %182 = vmatprep.subr.mxu0 0.0
    %183 = vmatpush1.msra.mxu0 0.0
    %184 = vmatprep.subr.mxu0 0.0
    %185 = vmatpush1.msra.mxu0 0.0
    %186 = vmatprep.mubr.f32.mxu0 0.0
    %187 = vmatmul.mubr.f32.gmra.mrb[0].mxu0 %v99
    %v188 = vpop.f32.mrb[0].mxu0
    %v189 = vadd.f32 %v95, %v188
    %v190 = vpop.f32.mrb[0].mxu0
    %191 = vmatprep.mubr.f32.mxu0 0.0
    %192 = vmatmul.mubr.f32.gmra.mrb[0].mxu0 %v102
    %v193 = vpop.f32.mrb[0].mxu0
    %v194 = vadd.f32 %v95, %v193
    %v195 = vpop.f32.mrb[0].mxu0
    %196 = vmatprep.mubr.f32.mxu0 0.0
    %197 = vmatmul.mubr.f32.gmra.mrb[0].mxu0 %v105
    %v198 = vpop.f32.mrb[0].mxu0
    %v199 = vadd.f32 %v95, %v198
    %v200 = vpop.f32.mrb[0].mxu0
    %201 = vmatprep.mubr.f32.mxu0 0.0
    %202 = vmatmul.mubr.f32.gmra.mrb[0].mxu0 %v108
    %v203 = vpop.f32.mrb[0].mxu0
    %v204 = vadd.f32 %v95, %v203
    %v205 = vpop.f32.mrb[0].mxu0
    %206 = vmatprep.mubr.f32.mxu0 0.0
    %207 = vmatmul.mubr.f32.gmra.mrb[0].mxu0 %v111
    %v208 = vpop.f32.mrb[0].mxu0
    %v209 = vadd.f32 %v95, %v208
    %v210 = vpop.f32.mrb[0].mxu0
    %211 = vmatprep.mubr.f32.mxu0 0.0
    %212 = vmatmul.mubr.f32.gmra.mrb[0].mxu0 %v114
    %v213 = vpop.f32.mrb[0].mxu0
    %v214 = vadd.f32 %v95, %v213
    %v215 = vpop.f32.mrb[0].mxu0
    %216 = vmatprep.mubr.f32.mxu0 0.0
    %217 = vmatmul.mubr.f32.gmra.mrb[0].mxu0 %v117
    %v218 = vpop.f32.mrb[0].mxu0
    %v219 = vadd.f32 %v95, %v218
    %v220 = vpop.f32.mrb[0].mxu0
    %221 = vmatprep.mubr.f32.mxu0 0.0
    %222 = vmatmul.mubr.f32.gmra.mrb[0].mxu0 %v120
    %v223 = vpop.f32.mrb[0].mxu0
    %v224 = vadd.f32 %v95, %v223
    %v225 = vpop.f32.mrb[0].mxu0
    %226 = vdwg.mxu0
    %v227 = vlaneseq
    %v228 = vand.u32 %v227, 127
    %vm229 = vcmp.lt.s32.totalorder %v228, 96
    %v230 = vsel %vm229, 0.5, 1.0
    %v231 = vsel %vm229, 0.5, 0.0
    %v232 = vld [vmem:[#allocation2] sm:$0xff]
    %v234 = vsel %vm97, %v232, 0
    %236 = vmatprep.subr.mxu0 0.0
    %237 = vmatpush1.msra.mxu0 %v74
    %238 = vmatprep.subr.mxu0 0.0
    %239 = vmatpush1.msra.mxu0 %v75
    %240 = vmatprep.subr.mxu0 0.0
    %241 = vmatpush1.msra.mxu0 %v76
    %242 = vmatprep.subr.mxu0 0.0
    %243 = vmatpush1.msra.mxu0 %v77
    %244 = vmatprep.subr.mxu0 0.0
    %245 = vmatpush1.msra.mxu0 0.0
    %246 = vmatprep.subr.mxu0 0.0
    %247 = vmatpush1.msra.mxu0 0.0
    %248 = vmatprep.subr.mxu0 0.0
    %249 = vmatpush1.msra.mxu0 0.0
    %250 = vmatprep.subr.mxu0 0.0
    %251 = vmatpush1.msra.mxu0 0.0
    %252 = vmatprep.subr.mxu0 0.0
    %253 = vmatpush1.msra.mxu0 0.0
    %254 = vmatprep.subr.mxu0 0.0
    %255 = vmatpush1.msra.mxu0 0.0
    %256 = vmatprep.subr.mxu0 0.0
    %257 = vmatpush1.msra.mxu0 0.0
    %258 = vmatprep.subr.mxu0 0.0
    %259 = vmatpush1.msra.mxu0 0.0
    %260 = vmatprep.subr.mxu0 0.0
    %261 = vmatpush1.msra.mxu0 0.0
    %262 = vmatprep.subr.mxu0 0.0
    %263 = vmatpush1.msra.mxu0 0.0
    %264 = vmatprep.subr.mxu0 0.0
    %265 = vmatpush1.msra.mxu0 0.0
    %266 = vmatprep.subr.mxu0 0.0
    %267 = vmatpush1.msra.mxu0 0.0
    %268 = vmatprep.subr.mxu0 0.0
    %269 = vmatpush1.msra.mxu0 0.0
    %270 = vmatprep.subr.mxu0 0.0
    %271 = vmatpush1.msra.mxu0 0.0
    %272 = vmatprep.subr.mxu0 0.0
    %273 = vmatpush1.msra.mxu0 0.0
    %274 = vmatprep.subr.mxu0 0.0
    %275 = vmatpush1.msra.mxu0 0.0
    %276 = vmatprep.subr.mxu0 0.0
    %277 = vmatpush1.msra.mxu0 0.0
    %278 = vmatprep.subr.mxu0 0.0
    %279 = vmatpush1.msra.mxu0 0.0
    %280 = vmatprep.subr.mxu0 0.0
    %281 = vmatpush1.msra.mxu0 0.0
    %282 = vmatprep.subr.mxu0 0.0
    %283 = vmatpush1.msra.mxu0 0.0
    %284 = vmatprep.subr.mxu0 0.0
    %285 = vmatpush1.msra.mxu0 0.0
    %286 = vmatprep.subr.mxu0 0.0
    %287 = vmatpush1.msra.mxu0 0.0
    %288 = vmatprep.subr.mxu0 0.0
    %289 = vmatpush1.msra.mxu0 0.0
    %290 = vmatprep.subr.mxu0 0.0
    %291 = vmatpush1.msra.mxu0 0.0
    %292 = vmatprep.subr.mxu0 0.0
    %293 = vmatpush1.msra.mxu0 0.0
    %294 = vmatprep.subr.mxu0 0.0
    %295 = vmatpush1.msra.mxu0 0.0
    %296 = vmatprep.subr.mxu0 0.0
    %297 = vmatpush1.msra.mxu0 0.0
    %298 = vmatprep.subr.mxu0 0.0
    %299 = vmatpush1.msra.mxu0 0.0
    %300 = vmatprep.mubr.f32.mxu0 0.0
    %301 = vmatmul.mubr.f32.gmra.mrb[0].mxu0 %v234
    %v302 = vpop.f32.mrb[0].mxu0
    %v303 = vadd.f32 0.0, %v302
    %v304 = vpop.f32.mrb[0].mxu0
    %305 = vdwg.mxu0
    %v307 = vrot.slane %v303, 1
    %v308 = vrot.slane %v303, 2
    %v309 = vrot.slane %v303, 3
    %v310 = vrot.slane %v303, 4
    %v311 = vrot.slane %v303, 5
    %v312 = vrot.slane %v303, 6
    %v313 = vrot.slane %v303, 7
    %v322 = vadd.f32 %v189, %v303
    %v323 = vadd.f32 %v194, %v307
    %v324 = vadd.f32 %v199, %v308
    %v325 = vadd.f32 %v204, %v309
    %v326 = vadd.f32 %v209, %v310
    %v327 = vadd.f32 %v214, %v311
    %v328 = vadd.f32 %v219, %v312
    %v329 = vadd.f32 %v224, %v313
    %v330 = vmul.f32 %v322, %v230
    %v331 = vmul.f32 %v323, %v230
    %v332 = vmul.f32 %v324, %v230
    %v333 = vmul.f32 %v325, %v230
    %v334 = vmul.f32 %v326, %v230
    %v335 = vmul.f32 %v327, %v230
    %v336 = vmul.f32 %v328, %v230
    %v337 = vmul.f32 %v329, %v230
    %v338 = vtanh.pop %v330
    %v339 = vtanh.pop %v331
    %v340 = vtanh.pop %v332
    %v341 = vtanh.pop %v333
    %v342 = vtanh.pop %v334
    %v343 = vtanh.pop %v335
    %v344 = vtanh.pop %v336
    %v345 = vtanh.pop %v337
    %v346 = vmul.f32 %v338, %v230
    %v347 = vmul.f32 %v339, %v230
    %v348 = vmul.f32 %v340, %v230
    %v349 = vmul.f32 %v341, %v230
    %v350 = vmul.f32 %v342, %v230
    %v351 = vmul.f32 %v343, %v230
    %v352 = vmul.f32 %v344, %v230
    %v353 = vmul.f32 %v345, %v230
    %v354 = vadd.f32 %v346, %v231
    %v355 = vadd.f32 %v347, %v231
    %v356 = vadd.f32 %v348, %v231
    %v357 = vadd.f32 %v349, %v231
    %v358 = vadd.f32 %v350, %v231
    %v359 = vadd.f32 %v351, %v231
    %v360 = vadd.f32 %v352, %v231
    %v361 = vadd.f32 %v353, %v231
    %v362 = vrot.slane %v232, 1
    %v363 = vrot.slane %v232, 2
    %v364 = vrot.slane %v232, 3
    %v365 = vrot.slane %v232, 4
    %v366 = vrot.slane %v232, 5
    %v367 = vrot.slane %v232, 6
    %v368 = vrot.slane %v232, 7
    %369 = vrot.lane.b32.xlu0 %v232, 32
    %v370 = vpop.permute.xlu0 %369
    %371 = vrot.lane.b32.xlu0 %v362, 32
    %v372 = vpop.permute.xlu0 %371
    %373 = vrot.lane.b32.xlu0 %v363, 32
    %v374 = vpop.permute.xlu0 %373
    %375 = vrot.lane.b32.xlu0 %v364, 32
    %v376 = vpop.permute.xlu0 %375
    %377 = vrot.lane.b32.xlu0 %v365, 32
    %v378 = vpop.permute.xlu0 %377
    %379 = vrot.lane.b32.xlu0 %v366, 32
    %v380 = vpop.permute.xlu0 %379
    %381 = vrot.lane.b32.xlu0 %v367, 32
    %v382 = vpop.permute.xlu0 %381
    %383 = vrot.lane.b32.xlu0 %v368, 32
    %v384 = vpop.permute.xlu0 %383
    %v393 = vmul.f32 %v354, %v370
    %v394 = vmul.f32 %v355, %v372
    %v395 = vmul.f32 %v356, %v374
    %v396 = vmul.f32 %v357, %v376
    %v397 = vmul.f32 %v358, %v378
    %v398 = vmul.f32 %v359, %v380
    %v399 = vmul.f32 %v360, %v382
    %v400 = vmul.f32 %v361, %v384
    %409 = vrot.lane.b32.xlu0 %v354, 32
    %v410 = vpop.permute.xlu0 %409
    %411 = vrot.lane.b32.xlu0 %v355, 32
    %v412 = vpop.permute.xlu0 %411
    %413 = vrot.lane.b32.xlu0 %v356, 32
    %v414 = vpop.permute.xlu0 %413
    %415 = vrot.lane.b32.xlu0 %v357, 32
    %v416 = vpop.permute.xlu0 %415
    %417 = vrot.lane.b32.xlu0 %v358, 32
    %v418 = vpop.permute.xlu0 %417
    %419 = vrot.lane.b32.xlu0 %v359, 32
    %v420 = vpop.permute.xlu0 %419
    %421 = vrot.lane.b32.xlu0 %v360, 32
    %v422 = vpop.permute.xlu0 %421
    %423 = vrot.lane.b32.xlu0 %v361, 32
    %v424 = vpop.permute.xlu0 %423
    %v433 = vmul.f32 %v354, %v410
    %v434 = vmul.f32 %v355, %v412
    %v435 = vmul.f32 %v356, %v414
    %v436 = vmul.f32 %v357, %v416
    %v437 = vmul.f32 %v358, %v418
    %v438 = vmul.f32 %v359, %v420
    %v439 = vmul.f32 %v360, %v422
    %v440 = vmul.f32 %v361, %v424
    %449 = vrot.lane.b32.xlu0 %v433, 32
    %v450 = vpop.permute.xlu0 %449
    %451 = vrot.lane.b32.xlu0 %v434, 32
    %v452 = vpop.permute.xlu0 %451
    %453 = vrot.lane.b32.xlu0 %v435, 32
    %v454 = vpop.permute.xlu0 %453
    %455 = vrot.lane.b32.xlu0 %v436, 32
    %v456 = vpop.permute.xlu0 %455
    %457 = vrot.lane.b32.xlu0 %v437, 32
    %v458 = vpop.permute.xlu0 %457
    %459 = vrot.lane.b32.xlu0 %v438, 32
    %v460 = vpop.permute.xlu0 %459
    %461 = vrot.lane.b32.xlu0 %v439, 32
    %v462 = vpop.permute.xlu0 %461
    %463 = vrot.lane.b32.xlu0 %v440, 32
    %v464 = vpop.permute.xlu0 %463
    %v473 = vadd.f32 %v393, %v450
    %v474 = vadd.f32 %v394, %v452
    %v475 = vadd.f32 %v395, %v454
    %v476 = vadd.f32 %v396, %v456
    %v477 = vadd.f32 %v397, %v458
    %v478 = vadd.f32 %v398, %v460
    %v479 = vadd.f32 %v399, %v462
    %v480 = vadd.f32 %v400, %v464
    %v481 = vtanh.pop %v473
    %v482 = vtanh.pop %v474
    %v483 = vtanh.pop %v475
    %v484 = vtanh.pop %v476
    %v485 = vtanh.pop %v477
    %v486 = vtanh.pop %v478
    %v487 = vtanh.pop %v479
    %v488 = vtanh.pop %v480
    %497 = vrot.lane.b32.xlu0 %v481, 32
    %v498 = vpop.permute.xlu0 %497
    %499 = vrot.lane.b32.xlu0 %v482, 32
    %v500 = vpop.permute.xlu0 %499
    %501 = vrot.lane.b32.xlu0 %v483, 32
    %v502 = vpop.permute.xlu0 %501
    %503 = vrot.lane.b32.xlu0 %v484, 32
    %v504 = vpop.permute.xlu0 %503
    %505 = vrot.lane.b32.xlu0 %v485, 32
    %v506 = vpop.permute.xlu0 %505
    %507 = vrot.lane.b32.xlu0 %v486, 32
    %v508 = vpop.permute.xlu0 %507
    %509 = vrot.lane.b32.xlu0 %v487, 32
    %v510 = vpop.permute.xlu0 %509
    %511 = vrot.lane.b32.xlu0 %v488, 32
    %v512 = vpop.permute.xlu0 %511
    %v521 = vmul.f32 %v354, %v498
    %v522 = vmul.f32 %v355, %v500
    %v523 = vmul.f32 %v356, %v502
    %v524 = vmul.f32 %v357, %v504
    %v525 = vmul.f32 %v358, %v506
    %v526 = vmul.f32 %v359, %v508
    %v527 = vmul.f32 %v360, %v510
    %v528 = vmul.f32 %v361, %v512
    %537 = vrot.lane.b32.xlu0 %v521, 64
    %v538 = vpop.permute.xlu0 %537
    %539 = vrot.lane.b32.xlu0 %v522, 64
    %v540 = vpop.permute.xlu0 %539
    %541 = vrot.lane.b32.xlu0 %v523, 64
    %v542 = vpop.permute.xlu0 %541
    %543 = vrot.lane.b32.xlu0 %v524, 64
    %v544 = vpop.permute.xlu0 %543
    %545 = vrot.lane.b32.xlu0 %v525, 64
    %v546 = vpop.permute.xlu0 %545
    %547 = vrot.lane.b32.xlu0 %v526, 64
    %v548 = vpop.permute.xlu0 %547
    %549 = vrot.lane.b32.xlu0 %v527, 64
    %v550 = vpop.permute.xlu0 %549
    %551 = vrot.lane.b32.xlu0 %v528, 64
    %v552 = vpop.permute.xlu0 %551
    %vm561 = vcmask 253952
    %562 = vst.msk [vmem:[#allocation10] sm:$0x1] %vm561, %v538
    %563 = vst.msk [vmem:[#allocation10 + $0x8] sm:$0x1] %vm561, %v540
    %564 = vst.msk [vmem:[#allocation10 + $0x10] sm:$0x1] %vm561, %v542
    %565 = vst.msk [vmem:[#allocation10 + $0x18] sm:$0x1] %vm561, %v544
    %566 = vst.msk [vmem:[#allocation10 + $0x20] sm:$0x1] %vm561, %v546
    %567 = vst.msk [vmem:[#allocation10 + $0x28] sm:$0x1] %vm561, %v548
    %568 = vst.msk [vmem:[#allocation10 + $0x30] sm:$0x1] %vm561, %v550
    %569 = vst.msk [vmem:[#allocation10 + $0x38] sm:$0x1] %vm561, %v552
    %v570 = vrot.slane %v522, 7
    %vm571 = vcmask 1041409
    %v572 = vsel %vm571, %v570, %v521
    %v573 = vrot.slane %v523, 6
    %vm574 = vcmask 1042434
    %v575 = vsel %vm574, %v573, %v572
    %v576 = vrot.slane %v524, 5
    %vm577 = vcmask 1043459
    %v578 = vsel %vm577, %v576, %v575
    %v579 = vrot.slane %v525, 4
    %vm580 = vcmask 1044484
    %v581 = vsel %vm580, %v579, %v578
    %v582 = vrot.slane %v526, 3
    %vm583 = vcmask 1045509
    %v584 = vsel %vm583, %v582, %v581
    %v585 = vrot.slane %v527, 2
    %vm586 = vcmask 1046534
    %v587 = vsel %vm586, %v585, %v584
    %v588 = vrot.slane %v528, 1
    %vm589 = vcmask 1047559
    %v590 = vsel %vm589, %v588, %v587
    %591 = vrot.lane.b32.xlu0 %v590, 64
    %v592 = vpop.permute.xlu0 %591
    %v593 = vsel %vm97, %v592, 0
    %595 = vmatprep.subr.mxu0 0.0
    %596 = vmatpush1.msra.mxu0 %v74
    %597 = vmatprep.subr.mxu0 0.0
    %598 = vmatpush1.msra.mxu0 %v75
    %599 = vmatprep.subr.mxu0 0.0
    %600 = vmatpush1.msra.mxu0 %v76
    %601 = vmatprep.subr.mxu0 0.0
    %602 = vmatpush1.msra.mxu0 %v77
    %603 = vmatprep.subr.mxu0 0.0
    %604 = vmatpush1.msra.mxu0 0.0
    %605 = vmatprep.subr.mxu0 0.0
    %606 = vmatpush1.msra.mxu0 0.0
    %607 = vmatprep.subr.mxu0 0.0
    %608 = vmatpush1.msra.mxu0 0.0
    %609 = vmatprep.subr.mxu0 0.0
    %610 = vmatpush1.msra.mxu0 0.0
    %611 = vmatprep.subr.mxu0 0.0
    %612 = vmatpush1.msra.mxu0 0.0
    %613 = vmatprep.subr.mxu0 0.0
    %614 = vmatpush1.msra.mxu0 0.0
    %615 = vmatprep.subr.mxu0 0.0
    %616 = vmatpush1.msra.mxu0 0.0
    %617 = vmatprep.subr.mxu0 0.0
    %618 = vmatpush1.msra.mxu0 0.0
    %619 = vmatprep.subr.mxu0 0.0
    %620 = vmatpush1.msra.mxu0 0.0
    %621 = vmatprep.subr.mxu0 0.0
    %622 = vmatpush1.msra.mxu0 0.0
    %623 = vmatprep.subr.mxu0 0.0
    %624 = vmatpush1.msra.mxu0 0.0
    %625 = vmatprep.subr.mxu0 0.0
    %626 = vmatpush1.msra.mxu0 0.0
    %627 = vmatprep.subr.mxu0 0.0
    %628 = vmatpush1.msra.mxu0 0.0
    %629 = vmatprep.subr.mxu0 0.0
    %630 = vmatpush1.msra.mxu0 0.0
    %631 = vmatprep.subr.mxu0 0.0
    %632 = vmatpush1.msra.mxu0 0.0
    %633 = vmatprep.subr.mxu0 0.0
    %634 = vmatpush1.msra.mxu0 0.0
    %635 = vmatprep.subr.mxu0 0.0
    %636 = vmatpush1.msra.mxu0 0.0
    %637 = vmatprep.subr.mxu0 0.0
    %638 = vmatpush1.msra.mxu0 0.0
    %639 = vmatprep.subr.mxu0 0.0
    %640 = vmatpush1.msra.mxu0 0.0
    %641 = vmatprep.subr.mxu0 0.0
    %642 = vmatpush1.msra.mxu0 0.0
    %643 = vmatprep.subr.mxu0 0.0
    %644 = vmatpush1.msra.mxu0 0.0
    %645 = vmatprep.subr.mxu0 0.0
    %646 = vmatpush1.msra.mxu0 0.0
    %647 = vmatprep.subr.mxu0 0.0
    %648 = vmatpush1.msra.mxu0 0.0
    %649 = vmatprep.subr.mxu0 0.0
    %650 = vmatpush1.msra.mxu0 0.0
    %651 = vmatprep.subr.mxu0 0.0
    %652 = vmatpush1.msra.mxu0 0.0
    %653 = vmatprep.subr.mxu0 0.0
    %654 = vmatpush1.msra.mxu0 0.0
    %655 = vmatprep.subr.mxu0 0.0
    %656 = vmatpush1.msra.mxu0 0.0
    %657 = vmatprep.subr.mxu0 0.0
    %658 = vmatpush1.msra.mxu0 0.0
    %659 = vmatprep.mubr.f32.mxu0 0.0
    %660 = vmatmul.mubr.f32.gmra.mrb[0].mxu0 %v593
    %v661 = vpop.f32.mrb[0].mxu0
    %v662 = vadd.f32 0.0, %v661
    %v663 = vpop.f32.mrb[0].mxu0
    %664 = vdwg.mxu0
    %v666 = vrot.slane %v662, 7
    %v667 = vrot.slane %v662, 1
    %v668 = vrot.slane %v662, 2
    %v669 = vrot.slane %v662, 3
    %v670 = vrot.slane %v662, 4
    %v671 = vrot.slane %v662, 5
    %v672 = vrot.slane %v662, 6
    %v681 = vadd.f32 %v189, %v666
    %v682 = vadd.f32 %v194, %v662
    %v683 = vadd.f32 %v199, %v667
    %v684 = vadd.f32 %v204, %v668
    %v685 = vadd.f32 %v209, %v669
    %v686 = vadd.f32 %v214, %v670
    %v687 = vadd.f32 %v219, %v671
    %v688 = vadd.f32 %v224, %v672
    %v689 = vmul.f32 %v681, %v230
    %v690 = vmul.f32 %v682, %v230
    %v691 = vmul.f32 %v683, %v230
    %v692 = vmul.f32 %v684, %v230
    %v693 = vmul.f32 %v685, %v230
    %v694 = vmul.f32 %v686, %v230
    %v695 = vmul.f32 %v687, %v230
    %v696 = vmul.f32 %v688, %v230
    %v697 = vtanh.pop %v689
    %v698 = vtanh.pop %v690
    %v699 = vtanh.pop %v691
    %v700 = vtanh.pop %v692
    %v701 = vtanh.pop %v693
    %v702 = vtanh.pop %v694
    %v703 = vtanh.pop %v695
    %v704 = vtanh.pop %v696
    %v705 = vmul.f32 %v697, %v230
    %v706 = vmul.f32 %v698, %v230
    %v707 = vmul.f32 %v699, %v230
    %v708 = vmul.f32 %v700, %v230
    %v709 = vmul.f32 %v701, %v230
    %v710 = vmul.f32 %v702, %v230
    %v711 = vmul.f32 %v703, %v230
    %v712 = vmul.f32 %v704, %v230
    %v713 = vadd.f32 %v705, %v231
    %v714 = vadd.f32 %v706, %v231
    %v715 = vadd.f32 %v707, %v231
    %v716 = vadd.f32 %v708, %v231
    %v717 = vadd.f32 %v709, %v231
    %v718 = vadd.f32 %v710, %v231
    %v719 = vadd.f32 %v711, %v231
    %v720 = vadd.f32 %v712, %v231
    %v729 = vrot.slane %v473, 7
    %v730 = vrot.slane %v474, 7
    %v731 = vrot.slane %v475, 7
    %v732 = vrot.slane %v476, 7
    %v733 = vrot.slane %v477, 7
    %v734 = vrot.slane %v478, 7
    %v735 = vrot.slane %v479, 7
    %v736 = vrot.slane %v480, 7
    %v745 = vmul.f32 %v713, %v729
    %v746 = vmul.f32 %v714, %v730
    %v747 = vmul.f32 %v715, %v731
    %v748 = vmul.f32 %v716, %v732
    %v749 = vmul.f32 %v717, %v733
    %v750 = vmul.f32 %v718, %v734
    %v751 = vmul.f32 %v719, %v735
    %v752 = vmul.f32 %v720, %v736
    %761 = vrot.lane.b32.xlu0 %v713, 32
    %v762 = vpop.permute.xlu0 %761
    %763 = vrot.lane.b32.xlu0 %v714, 32
    %v764 = vpop.permute.xlu0 %763
    %765 = vrot.lane.b32.xlu0 %v715, 32
    %v766 = vpop.permute.xlu0 %765
    %767 = vrot.lane.b32.xlu0 %v716, 32
    %v768 = vpop.permute.xlu0 %767
    %769 = vrot.lane.b32.xlu0 %v717, 32
    %v770 = vpop.permute.xlu0 %769
    %771 = vrot.lane.b32.xlu0 %v718, 32
    %v772 = vpop.permute.xlu0 %771
    %773 = vrot.lane.b32.xlu0 %v719, 32
    %v774 = vpop.permute.xlu0 %773
    %775 = vrot.lane.b32.xlu0 %v720, 32
    %v776 = vpop.permute.xlu0 %775
    %v785 = vmul.f32 %v713, %v762
    %v786 = vmul.f32 %v714, %v764
    %v787 = vmul.f32 %v715, %v766
    %v788 = vmul.f32 %v716, %v768
    %v789 = vmul.f32 %v717, %v770
    %v790 = vmul.f32 %v718, %v772
    %v791 = vmul.f32 %v719, %v774
    %v792 = vmul.f32 %v720, %v776
    %801 = vrot.lane.b32.xlu0 %v785, 32
    %v802 = vpop.permute.xlu0 %801
    %803 = vrot.lane.b32.xlu0 %v786, 32
    %v804 = vpop.permute.xlu0 %803
    %805 = vrot.lane.b32.xlu0 %v787, 32
    %v806 = vpop.permute.xlu0 %805
    %807 = vrot.lane.b32.xlu0 %v788, 32
    %v808 = vpop.permute.xlu0 %807
    %809 = vrot.lane.b32.xlu0 %v789, 32
    %v810 = vpop.permute.xlu0 %809
    %811 = vrot.lane.b32.xlu0 %v790, 32
    %v812 = vpop.permute.xlu0 %811
    %813 = vrot.lane.b32.xlu0 %v791, 32
    %v814 = vpop.permute.xlu0 %813
    %815 = vrot.lane.b32.xlu0 %v792, 32
    %v816 = vpop.permute.xlu0 %815
    %v825 = vadd.f32 %v745, %v802
    %v826 = vadd.f32 %v746, %v804
    %v827 = vadd.f32 %v747, %v806
    %v828 = vadd.f32 %v748, %v808
    %v829 = vadd.f32 %v749, %v810
    %v830 = vadd.f32 %v750, %v812
    %v831 = vadd.f32 %v751, %v814
    %v832 = vadd.f32 %v752, %v816
    %v833 = vtanh.pop %v825
    %v834 = vtanh.pop %v826
    %v835 = vtanh.pop %v827
    %v836 = vtanh.pop %v828
    %v837 = vtanh.pop %v829
    %v838 = vtanh.pop %v830
    %v839 = vtanh.pop %v831
    %v840 = vtanh.pop %v832
    %849 = vrot.lane.b32.xlu0 %v833, 32
    %v850 = vpop.permute.xlu0 %849
    %851 = vrot.lane.b32.xlu0 %v834, 32
    %v852 = vpop.permute.xlu0 %851
    %853 = vrot.lane.b32.xlu0 %v835, 32
    %v854 = vpop.permute.xlu0 %853
    %855 = vrot.lane.b32.xlu0 %v836, 32
    %v856 = vpop.permute.xlu0 %855
    %857 = vrot.lane.b32.xlu0 %v837, 32
    %v858 = vpop.permute.xlu0 %857
    %859 = vrot.lane.b32.xlu0 %v838, 32
    %v860 = vpop.permute.xlu0 %859
    %861 = vrot.lane.b32.xlu0 %v839, 32
    %v862 = vpop.permute.xlu0 %861
    %863 = vrot.lane.b32.xlu0 %v840, 32
    %v864 = vpop.permute.xlu0 %863
    %v873 = vmul.f32 %v713, %v850
    %v874 = vmul.f32 %v714, %v852
    %v875 = vmul.f32 %v715, %v854
    %v876 = vmul.f32 %v716, %v856
    %v877 = vmul.f32 %v717, %v858
    %v878 = vmul.f32 %v718, %v860
    %v879 = vmul.f32 %v719, %v862
    %v880 = vmul.f32 %v720, %v864
    %889 = vrot.lane.b32.xlu0 %v873, 64
    %v890 = vpop.permute.xlu0 %889
    %891 = vrot.lane.b32.xlu0 %v874, 64
    %v892 = vpop.permute.xlu0 %891
    %893 = vrot.lane.b32.xlu0 %v875, 64
    %v894 = vpop.permute.xlu0 %893
    %895 = vrot.lane.b32.xlu0 %v876, 64
    %v896 = vpop.permute.xlu0 %895
    %897 = vrot.lane.b32.xlu0 %v877, 64
    %v898 = vpop.permute.xlu0 %897
    %899 = vrot.lane.b32.xlu0 %v878, 64
    %v900 = vpop.permute.xlu0 %899
    %901 = vrot.lane.b32.xlu0 %v879, 64
    %v902 = vpop.permute.xlu0 %901
    %903 = vrot.lane.b32.xlu0 %v880, 64
    %v904 = vpop.permute.xlu0 %903
    %vm913 = vcmask 254977
    %914 = vst.msk [vmem:[#allocation10] sm:$0x2] %vm913, %v890
    %915 = vst.msk [vmem:[#allocation10 + $0x8] sm:$0x2] %vm913, %v892
    %916 = vst.msk [vmem:[#allocation10 + $0x10] sm:$0x2] %vm913, %v894
    %917 = vst.msk [vmem:[#allocation10 + $0x18] sm:$0x2] %vm913, %v896
    %918 = vst.msk [vmem:[#allocation10 + $0x20] sm:$0x2] %vm913, %v898
    %919 = vst.msk [vmem:[#allocation10 + $0x28] sm:$0x2] %vm913, %v900
    %920 = vst.msk [vmem:[#allocation10 + $0x30] sm:$0x2] %vm913, %v902
    %921 = vst.msk [vmem:[#allocation10 + $0x38] sm:$0x2] %vm913, %v904
    %v922 = vrot.slane %v873, 1
    %v923 = vsel %vm571, %v874, %v922
    %v924 = vrot.slane %v875, 7
    %v925 = vsel %vm574, %v924, %v923
    %v926 = vrot.slane %v876, 6
    %v927 = vsel %vm577, %v926, %v925
    %v928 = vrot.slane %v877, 5
    %v929 = vsel %vm580, %v928, %v927
    %v930 = vrot.slane %v878, 4
    %v931 = vsel %vm583, %v930, %v929
    %v932 = vrot.slane %v879, 3
    %v933 = vsel %vm586, %v932, %v931
    %v934 = vrot.slane %v880, 2
    %v935 = vsel %vm589, %v934, %v933
    %936 = vrot.lane.b32.xlu0 %v935, 64
    %v937 = vpop.permute.xlu0 %936
    %v938 = vsel %vm97, %v937, 0
    %940 = vmatprep.subr.mxu0 0.0
    %941 = vmatpush1.msra.mxu0 %v74
    %942 = vmatprep.subr.mxu0 0.0
    %943 = vmatpush1.msra.mxu0 %v75
    %944 = vmatprep.subr.mxu0 0.0
    %945 = vmatpush1.msra.mxu0 %v76
    %946 = vmatprep.subr.mxu0 0.0
    %947 = vmatpush1.msra.mxu0 %v77
    %948 = vmatprep.subr.mxu0 0.0
    %949 = vmatpush1.msra.mxu0 0.0
    %950 = vmatprep.subr.mxu0 0.0
    %951 = vmatpush1.msra.mxu0 0.0
    %952 = vmatprep.subr.mxu0 0.0
    %953 = vmatpush1.msra.mxu0 0.0
    %954 = vmatprep.subr.mxu0 0.0
    %955 = vmatpush1.msra.mxu0 0.0
    %956 = vmatprep.subr.mxu0 0.0
    %957 = vmatpush1.msra.mxu0 0.0
    %958 = vmatprep.subr.mxu0 0.0
    %959 = vmatpush1.msra.mxu0 0.0
    %960 = vmatprep.subr.mxu0 0.0
    %961 = vmatpush1.msra.mxu0 0.0
    %962 = vmatprep.subr.mxu0 0.0
    %963 = vmatpush1.msra.mxu0 0.0
    %964 = vmatprep.subr.mxu0 0.0
    %965 = vmatpush1.msra.mxu0 0.0
    %966 = vmatprep.subr.mxu0 0.0
    %967 = vmatpush1.msra.mxu0 0.0
    %968 = vmatprep.subr.mxu0 0.0
    %969 = vmatpush1.msra.mxu0 0.0
    %970 = vmatprep.subr.mxu0 0.0
    %971 = vmatpush1.msra.mxu0 0.0
    %972 = vmatprep.subr.mxu0 0.0
    %973 = vmatpush1.msra.mxu0 0.0
    %974 = vmatprep.subr.mxu0 0.0
    %975 = vmatpush1.msra.mxu0 0.0
    %976 = vmatprep.subr.mxu0 0.0
    %977 = vmatpush1.msra.mxu0 0.0
    %978 = vmatprep.subr.mxu0 0.0
    %979 = vmatpush1.msra.mxu0 0.0
    %980 = vmatprep.subr.mxu0 0.0
    %981 = vmatpush1.msra.mxu0 0.0
    %982 = vmatprep.subr.mxu0 0.0
    %983 = vmatpush1.msra.mxu0 0.0
    %984 = vmatprep.subr.mxu0 0.0
    %985 = vmatpush1.msra.mxu0 0.0
    %986 = vmatprep.subr.mxu0 0.0
    %987 = vmatpush1.msra.mxu0 0.0
    %988 = vmatprep.subr.mxu0 0.0
    %989 = vmatpush1.msra.mxu0 0.0
    %990 = vmatprep.subr.mxu0 0.0
    %991 = vmatpush1.msra.mxu0 0.0
    %992 = vmatprep.subr.mxu0 0.0
    %993 = vmatpush1.msra.mxu0 0.0
    %994 = vmatprep.subr.mxu0 0.0
    %995 = vmatpush1.msra.mxu0 0.0
    %996 = vmatprep.subr.mxu0 0.0
    %997 = vmatpush1.msra.mxu0 0.0
    %998 = vmatprep.subr.mxu0 0.0
    %999 = vmatpush1.msra.mxu0 0.0
    %1000 = vmatprep.subr.mxu0 0.0
    %1001 = vmatpush1.msra.mxu0 0.0
    %1002 = vmatprep.subr.mxu0 0.0
    %1003 = vmatpush1.msra.mxu0 0.0
    %1004 = vmatprep.mubr.f32.mxu0 0.0
    %1005 = vmatmul.mubr.f32.gmra.mrb[0].mxu0 %v938
    %v1006 = vpop.f32.mrb[0].mxu0
    %v1007 = vadd.f32 0.0, %v1006
    %v1008 = vpop.f32.mrb[0].mxu0
    %1009 = vdwg.mxu0
    %v1011 = vrot.slane %v1007, 6
    %v1012 = vrot.slane %v1007, 7
    %v1013 = vrot.slane %v1007, 1
    %v1014 = vrot.slane %v1007, 2
    %v1015 = vrot.slane %v1007, 3
    %v1016 = vrot.slane %v1007, 4
    %v1017 = vrot.slane %v1007, 5
    %v1026 = vadd.f32 %v189, %v1011
    %v1027 = vadd.f32 %v194, %v1012
    %v1028 = vadd.f32 %v199, %v1007
    %v1029 = vadd.f32 %v204, %v1013
    %v1030 = vadd.f32 %v209, %v1014
    %v1031 = vadd.f32 %v214, %v1015
    %v1032 = vadd.f32 %v219, %v1016
    %v1033 = vadd.f32 %v224, %v1017
    %v1034 = vmul.f32 %v1026, %v230
    %v1035 = vmul.f32 %v1027, %v230
    %v1036 = vmul.f32 %v1028, %v230
    %v1037 = vmul.f32 %v1029, %v230
    %v1038 = vmul.f32 %v1030, %v230
    %v1039 = vmul.f32 %v1031, %v230
    %v1040 = vmul.f32 %v1032, %v230
    %v1041 = vmul.f32 %v1033, %v230
    %v1042 = vtanh.pop %v1034
    %v1043 = vtanh.pop %v1035
    %v1044 = vtanh.pop %v1036
    %v1045 = vtanh.pop %v1037
    %v1046 = vtanh.pop %v1038
    %v1047 = vtanh.pop %v1039
    %v1048 = vtanh.pop %v1040
    %v1049 = vtanh.pop %v1041
    %v1050 = vmul.f32 %v1042, %v230
    %v1051 = vmul.f32 %v1043, %v230
    %v1052 = vmul.f32 %v1044, %v230
    %v1053 = vmul.f32 %v1045, %v230
    %v1054 = vmul.f32 %v1046, %v230
    %v1055 = vmul.f32 %v1047, %v230
    %v1056 = vmul.f32 %v1048, %v230
    %v1057 = vmul.f32 %v1049, %v230
    %v1058 = vadd.f32 %v1050, %v231
    %v1059 = vadd.f32 %v1051, %v231
    %v1060 = vadd.f32 %v1052, %v231
    %v1061 = vadd.f32 %v1053, %v231
    %v1062 = vadd.f32 %v1054, %v231
    %v1063 = vadd.f32 %v1055, %v231
    %v1064 = vadd.f32 %v1056, %v231
    %v1065 = vadd.f32 %v1057, %v231
    %v1074 = vrot.slane %v825, 7
    %v1075 = vrot.slane %v826, 7
    %v1076 = vrot.slane %v827, 7
    %v1077 = vrot.slane %v828, 7
    %v1078 = vrot.slane %v829, 7
    %v1079 = vrot.slane %v830, 7
    %v1080 = vrot.slane %v831, 7
    %v1081 = vrot.slane %v832, 7
    %v1090 = vmul.f32 %v1058, %v1074
    %v1091 = vmul.f32 %v1059, %v1075
    %v1092 = vmul.f32 %v1060, %v1076
    %v1093 = vmul.f32 %v1061, %v1077
    %v1094 = vmul.f32 %v1062, %v1078
    %v1095 = vmul.f32 %v1063, %v1079
    %v1096 = vmul.f32 %v1064, %v1080
    %v1097 = vmul.f32 %v1065, %v1081
    %1106 = vrot.lane.b32.xlu0 %v1058, 32
    %v1107 = vpop.permute.xlu0 %1106
    %1108 = vrot.lane.b32.xlu0 %v1059, 32
    %v1109 = vpop.permute.xlu0 %1108
    %1110 = vrot.lane.b32.xlu0 %v1060, 32
    %v1111 = vpop.permute.xlu0 %1110
    %1112 = vrot.lane.b32.xlu0 %v1061, 32
    %v1113 = vpop.permute.xlu0 %1112
    %1114 = vrot.lane.b32.xlu0 %v1062, 32
    %v1115 = vpop.permute.xlu0 %1114
    %1116 = vrot.lane.b32.xlu0 %v1063, 32
    %v1117 = vpop.permute.xlu0 %1116
    %1118 = vrot.lane.b32.xlu0 %v1064, 32
    %v1119 = vpop.permute.xlu0 %1118
    %1120 = vrot.lane.b32.xlu0 %v1065, 32
    %v1121 = vpop.permute.xlu0 %1120
    %v1130 = vmul.f32 %v1058, %v1107
    %v1131 = vmul.f32 %v1059, %v1109
    %v1132 = vmul.f32 %v1060, %v1111
    %v1133 = vmul.f32 %v1061, %v1113
    %v1134 = vmul.f32 %v1062, %v1115
    %v1135 = vmul.f32 %v1063, %v1117
    %v1136 = vmul.f32 %v1064, %v1119
    %v1137 = vmul.f32 %v1065, %v1121
    %1146 = vrot.lane.b32.xlu0 %v1130, 32
    %v1147 = vpop.permute.xlu0 %1146
    %1148 = vrot.lane.b32.xlu0 %v1131, 32
    %v1149 = vpop.permute.xlu0 %1148
    %1150 = vrot.lane.b32.xlu0 %v1132, 32
    %v1151 = vpop.permute.xlu0 %1150
    %1152 = vrot.lane.b32.xlu0 %v1133, 32
    %v1153 = vpop.permute.xlu0 %1152
    %1154 = vrot.lane.b32.xlu0 %v1134, 32
    %v1155 = vpop.permute.xlu0 %1154
    %1156 = vrot.lane.b32.xlu0 %v1135, 32
    %v1157 = vpop.permute.xlu0 %1156
    %1158 = vrot.lane.b32.xlu0 %v1136, 32
    %v1159 = vpop.permute.xlu0 %1158
    %1160 = vrot.lane.b32.xlu0 %v1137, 32
    %v1161 = vpop.permute.xlu0 %1160
    %v1170 = vadd.f32 %v1090, %v1147
    %v1171 = vadd.f32 %v1091, %v1149
    %v1172 = vadd.f32 %v1092, %v1151
    %v1173 = vadd.f32 %v1093, %v1153
    %v1174 = vadd.f32 %v1094, %v1155
    %v1175 = vadd.f32 %v1095, %v1157
    %v1176 = vadd.f32 %v1096, %v1159
    %v1177 = vadd.f32 %v1097, %v1161
    %v1178 = vtanh.pop %v1170
    %v1179 = vtanh.pop %v1171
    %v1180 = vtanh.pop %v1172
    %v1181 = vtanh.pop %v1173
    %v1182 = vtanh.pop %v1174
    %v1183 = vtanh.pop %v1175
    %v1184 = vtanh.pop %v1176
    %v1185 = vtanh.pop %v1177
    %1194 = vrot.lane.b32.xlu0 %v1178, 32
    %v1195 = vpop.permute.xlu0 %1194
    %1196 = vrot.lane.b32.xlu0 %v1179, 32
    %v1197 = vpop.permute.xlu0 %1196
    %1198 = vrot.lane.b32.xlu0 %v1180, 32
    %v1199 = vpop.permute.xlu0 %1198
    %1200 = vrot.lane.b32.xlu0 %v1181, 32
    %v1201 = vpop.permute.xlu0 %1200
    %1202 = vrot.lane.b32.xlu0 %v1182, 32
    %v1203 = vpop.permute.xlu0 %1202
    %1204 = vrot.lane.b32.xlu0 %v1183, 32
    %v1205 = vpop.permute.xlu0 %1204
    %1206 = vrot.lane.b32.xlu0 %v1184, 32
    %v1207 = vpop.permute.xlu0 %1206
    %1208 = vrot.lane.b32.xlu0 %v1185, 32
    %v1209 = vpop.permute.xlu0 %1208
    %v1218 = vmul.f32 %v1058, %v1195
    %v1219 = vmul.f32 %v1059, %v1197
    %v1220 = vmul.f32 %v1060, %v1199
    %v1221 = vmul.f32 %v1061, %v1201
    %v1222 = vmul.f32 %v1062, %v1203
    %v1223 = vmul.f32 %v1063, %v1205
    %v1224 = vmul.f32 %v1064, %v1207
    %v1225 = vmul.f32 %v1065, %v1209
    %1234 = vrot.lane.b32.xlu0 %v1218, 64
    %v1235 = vpop.permute.xlu0 %1234
    %1236 = vrot.lane.b32.xlu0 %v1219, 64
    %v1237 = vpop.permute.xlu0 %1236
    %1238 = vrot.lane.b32.xlu0 %v1220, 64
    %v1239 = vpop.permute.xlu0 %1238
    %1240 = vrot.lane.b32.xlu0 %v1221, 64
    %v1241 = vpop.permute.xlu0 %1240
    %1242 = vrot.lane.b32.xlu0 %v1222, 64
    %v1243 = vpop.permute.xlu0 %1242
    %1244 = vrot.lane.b32.xlu0 %v1223, 64
    %v1245 = vpop.permute.xlu0 %1244
    %1246 = vrot.lane.b32.xlu0 %v1224, 64
    %v1247 = vpop.permute.xlu0 %1246
    %1248 = vrot.lane.b32.xlu0 %v1225, 64
    %v1249 = vpop.permute.xlu0 %1248
    %vm1258 = vcmask 256002
    %1259 = vst.msk [vmem:[#allocation10] sm:$0x4] %vm1258, %v1235
    %1260 = vst.msk [vmem:[#allocation10 + $0x8] sm:$0x4] %vm1258, %v1237
    %1261 = vst.msk [vmem:[#allocation10 + $0x10] sm:$0x4] %vm1258, %v1239
    %1262 = vst.msk [vmem:[#allocation10 + $0x18] sm:$0x4] %vm1258, %v1241
    %1263 = vst.msk [vmem:[#allocation10 + $0x20] sm:$0x4] %vm1258, %v1243
    %1264 = vst.msk [vmem:[#allocation10 + $0x28] sm:$0x4] %vm1258, %v1245
    %1265 = vst.msk [vmem:[#allocation10 + $0x30] sm:$0x4] %vm1258, %v1247
    %1266 = vst.msk [vmem:[#allocation10 + $0x38] sm:$0x4] %vm1258, %v1249
    %v1267 = vrot.slane %v1218, 2
    %v1268 = vrot.slane %v1219, 1
    %v1269 = vsel %vm571, %v1268, %v1267
    %v1270 = vsel %vm574, %v1220, %v1269
    %v1271 = vrot.slane %v1221, 7
    %v1272 = vsel %vm577, %v1271, %v1270
    %v1273 = vrot.slane %v1222, 6
    %v1274 = vsel %vm580, %v1273, %v1272
    %v1275 = vrot.slane %v1223, 5
    %v1276 = vsel %vm583, %v1275, %v1274
    %v1277 = vrot.slane %v1224, 4
    %v1278 = vsel %vm586, %v1277, %v1276
    %v1279 = vrot.slane %v1225, 3
    %v1280 = vsel %vm589, %v1279, %v1278
    %1281 = vrot.lane.b32.xlu0 %v1280, 64
    %v1282 = vpop.permute.xlu0 %1281
    %v1283 = vsel %vm97, %v1282, 0
    %1285 = vmatprep.subr.mxu0 0.0
    %1286 = vmatpush1.msra.mxu0 %v74
    %1287 = vmatprep.subr.mxu0 0.0
    %1288 = vmatpush1.msra.mxu0 %v75
    %1289 = vmatprep.subr.mxu0 0.0
    %1290 = vmatpush1.msra.mxu0 %v76
    %1291 = vmatprep.subr.mxu0 0.0
    %1292 = vmatpush1.msra.mxu0 %v77
    %1293 = vmatprep.subr.mxu0 0.0
    %1294 = vmatpush1.msra.mxu0 0.0
    %1295 = vmatprep.subr.mxu0 0.0
    %1296 = vmatpush1.msra.mxu0 0.0
    %1297 = vmatprep.subr.mxu0 0.0
    %1298 = vmatpush1.msra.mxu0 0.0
    %1299 = vmatprep.subr.mxu0 0.0
    %1300 = vmatpush1.msra.mxu0 0.0
    %1301 = vmatprep.subr.mxu0 0.0
    %1302 = vmatpush1.msra.mxu0 0.0
    %1303 = vmatprep.subr.mxu0 0.0
    %1304 = vmatpush1.msra.mxu0 0.0
    %1305 = vmatprep.subr.mxu0 0.0
    %1306 = vmatpush1.msra.mxu0 0.0
    %1307 = vmatprep.subr.mxu0 0.0
    %1308 = vmatpush1.msra.mxu0 0.0
    %1309 = vmatprep.subr.mxu0 0.0
    %1310 = vmatpush1.msra.mxu0 0.0
    %1311 = vmatprep.subr.mxu0 0.0
    %1312 = vmatpush1.msra.mxu0 0.0
    %1313 = vmatprep.subr.mxu0 0.0
    %1314 = vmatpush1.msra.mxu0 0.0
    %1315 = vmatprep.subr.mxu0 0.0
    %1316 = vmatpush1.msra.mxu0 0.0
    %1317 = vmatprep.subr.mxu0 0.0
    %1318 = vmatpush1.msra.mxu0 0.0
    %1319 = vmatprep.subr.mxu0 0.0
    %1320 = vmatpush1.msra.mxu0 0.0
    %1321 = vmatprep.subr.mxu0 0.0
    %1322 = vmatpush1.msra.mxu0 0.0
    %1323 = vmatprep.subr.mxu0 0.0
    %1324 = vmatpush1.msra.mxu0 0.0
    %1325 = vmatprep.subr.mxu0 0.0
    %1326 = vmatpush1.msra.mxu0 0.0
    %1327 = vmatprep.subr.mxu0 0.0
    %1328 = vmatpush1.msra.mxu0 0.0
    %1329 = vmatprep.subr.mxu0 0.0
    %1330 = vmatpush1.msra.mxu0 0.0
    %1331 = vmatprep.subr.mxu0 0.0
    %1332 = vmatpush1.msra.mxu0 0.0
    %1333 = vmatprep.subr.mxu0 0.0
    %1334 = vmatpush1.msra.mxu0 0.0
    %1335 = vmatprep.subr.mxu0 0.0
    %1336 = vmatpush1.msra.mxu0 0.0
    %1337 = vmatprep.subr.mxu0 0.0
    %1338 = vmatpush1.msra.mxu0 0.0
    %1339 = vmatprep.subr.mxu0 0.0
    %1340 = vmatpush1.msra.mxu0 0.0
    %1341 = vmatprep.subr.mxu0 0.0
    %1342 = vmatpush1.msra.mxu0 0.0
    %1343 = vmatprep.subr.mxu0 0.0
    %1344 = vmatpush1.msra.mxu0 0.0
    %1345 = vmatprep.subr.mxu0 0.0
    %1346 = vmatpush1.msra.mxu0 0.0
    %1347 = vmatprep.subr.mxu0 0.0
    %1348 = vmatpush1.msra.mxu0 0.0
    %1349 = vmatprep.mubr.f32.mxu0 0.0
    %1350 = vmatmul.mubr.f32.gmra.mrb[0].mxu0 %v1283
    %v1351 = vpop.f32.mrb[0].mxu0
    %v1352 = vadd.f32 0.0, %v1351
    %v1353 = vpop.f32.mrb[0].mxu0
    %1354 = vdwg.mxu0
    %v1356 = vrot.slane %v1352, 5
    %v1357 = vrot.slane %v1352, 6
    %v1358 = vrot.slane %v1352, 7
    %v1359 = vrot.slane %v1352, 1
    %v1360 = vrot.slane %v1352, 2
    %v1361 = vrot.slane %v1352, 3
    %v1362 = vrot.slane %v1352, 4
    %v1371 = vadd.f32 %v189, %v1356
    %v1372 = vadd.f32 %v194, %v1357
    %v1373 = vadd.f32 %v199, %v1358
    %v1374 = vadd.f32 %v204, %v1352
    %v1375 = vadd.f32 %v209, %v1359
    %v1376 = vadd.f32 %v214, %v1360
    %v1377 = vadd.f32 %v219, %v1361
    %v1378 = vadd.f32 %v224, %v1362
    %v1379 = vmul.f32 %v1371, %v230
    %v1380 = vmul.f32 %v1372, %v230
    %v1381 = vmul.f32 %v1373, %v230
    %v1382 = vmul.f32 %v1374, %v230
    %v1383 = vmul.f32 %v1375, %v230
    %v1384 = vmul.f32 %v1376, %v230
    %v1385 = vmul.f32 %v1377, %v230
    %v1386 = vmul.f32 %v1378, %v230
    %v1387 = vtanh.pop %v1379
    %v1388 = vtanh.pop %v1380
    %v1389 = vtanh.pop %v1381
    %v1390 = vtanh.pop %v1382
    %v1391 = vtanh.pop %v1383
    %v1392 = vtanh.pop %v1384
    %v1393 = vtanh.pop %v1385
    %v1394 = vtanh.pop %v1386
    %v1395 = vmul.f32 %v1387, %v230
    %v1396 = vmul.f32 %v1388, %v230
    %v1397 = vmul.f32 %v1389, %v230
    %v1398 = vmul.f32 %v1390, %v230
    %v1399 = vmul.f32 %v1391, %v230
    %v1400 = vmul.f32 %v1392, %v230
    %v1401 = vmul.f32 %v1393, %v230
    %v1402 = vmul.f32 %v1394, %v230
    %v1403 = vadd.f32 %v1395, %v231
    %v1404 = vadd.f32 %v1396, %v231
    %v1405 = vadd.f32 %v1397, %v231
    %v1406 = vadd.f32 %v1398, %v231
    %v1407 = vadd.f32 %v1399, %v231
    %v1408 = vadd.f32 %v1400, %v231
    %v1409 = vadd.f32 %v1401, %v231
    %v1410 = vadd.f32 %v1402, %v231
    %v1419 = vrot.slane %v1170, 7
    %v1420 = vrot.slane %v1171, 7
    %v1421 = vrot.slane %v1172, 7
    %v1422 = vrot.slane %v1173, 7
    %v1423 = vrot.slane %v1174, 7
    %v1424 = vrot.slane %v1175, 7
    %v1425 = vrot.slane %v1176, 7
    %v1426 = vrot.slane %v1177, 7
    %v1435 = vmul.f32 %v1403, %v1419
    %v1436 = vmul.f32 %v1404, %v1420
    %v1437 = vmul.f32 %v1405, %v1421
    %v1438 = vmul.f32 %v1406, %v1422
    %v1439 = vmul.f32 %v1407, %v1423
    %v1440 = vmul.f32 %v1408, %v1424
    %v1441 = vmul.f32 %v1409, %v1425
    %v1442 = vmul.f32 %v1410, %v1426
    %1451 = vrot.lane.b32.xlu0 %v1403, 32
    %v1452 = vpop.permute.xlu0 %1451
    %1453 = vrot.lane.b32.xlu0 %v1404, 32
    %v1454 = vpop.permute.xlu0 %1453
    %1455 = vrot.lane.b32.xlu0 %v1405, 32
    %v1456 = vpop.permute.xlu0 %1455
    %1457 = vrot.lane.b32.xlu0 %v1406, 32
    %v1458 = vpop.permute.xlu0 %1457
    %1459 = vrot.lane.b32.xlu0 %v1407, 32
    %v1460 = vpop.permute.xlu0 %1459
    %1461 = vrot.lane.b32.xlu0 %v1408, 32
    %v1462 = vpop.permute.xlu0 %1461
    %1463 = vrot.lane.b32.xlu0 %v1409, 32
    %v1464 = vpop.permute.xlu0 %1463
    %1465 = vrot.lane.b32.xlu0 %v1410, 32
    %v1466 = vpop.permute.xlu0 %1465
    %v1475 = vmul.f32 %v1403, %v1452
    %v1476 = vmul.f32 %v1404, %v1454
    %v1477 = vmul.f32 %v1405, %v1456
    %v1478 = vmul.f32 %v1406, %v1458
    %v1479 = vmul.f32 %v1407, %v1460
    %v1480 = vmul.f32 %v1408, %v1462
    %v1481 = vmul.f32 %v1409, %v1464
    %v1482 = vmul.f32 %v1410, %v1466
    %1491 = vrot.lane.b32.xlu0 %v1475, 32
    %v1492 = vpop.permute.xlu0 %1491
    %1493 = vrot.lane.b32.xlu0 %v1476, 32
    %v1494 = vpop.permute.xlu0 %1493
    %1495 = vrot.lane.b32.xlu0 %v1477, 32
    %v1496 = vpop.permute.xlu0 %1495
    %1497 = vrot.lane.b32.xlu0 %v1478, 32
    %v1498 = vpop.permute.xlu0 %1497
    %1499 = vrot.lane.b32.xlu0 %v1479, 32
    %v1500 = vpop.permute.xlu0 %1499
    %1501 = vrot.lane.b32.xlu0 %v1480, 32
    %v1502 = vpop.permute.xlu0 %1501
    %1503 = vrot.lane.b32.xlu0 %v1481, 32
    %v1504 = vpop.permute.xlu0 %1503
    %1505 = vrot.lane.b32.xlu0 %v1482, 32
    %v1506 = vpop.permute.xlu0 %1505
    %v1515 = vadd.f32 %v1435, %v1492
    %v1516 = vadd.f32 %v1436, %v1494
    %v1517 = vadd.f32 %v1437, %v1496
    %v1518 = vadd.f32 %v1438, %v1498
    %v1519 = vadd.f32 %v1439, %v1500
    %v1520 = vadd.f32 %v1440, %v1502
    %v1521 = vadd.f32 %v1441, %v1504
    %v1522 = vadd.f32 %v1442, %v1506
    %v1523 = vtanh.pop %v1515
    %v1524 = vtanh.pop %v1516
    %v1525 = vtanh.pop %v1517
    %v1526 = vtanh.pop %v1518
    %v1527 = vtanh.pop %v1519
    %v1528 = vtanh.pop %v1520
    %v1529 = vtanh.pop %v1521
    %v1530 = vtanh.pop %v1522
    %1539 = vrot.lane.b32.xlu0 %v1523, 32
    %v1540 = vpop.permute.xlu0 %1539
    %1541 = vrot.lane.b32.xlu0 %v1524, 32
    %v1542 = vpop.permute.xlu0 %1541
    %1543 = vrot.lane.b32.xlu0 %v1525, 32
    %v1544 = vpop.permute.xlu0 %1543
    %1545 = vrot.lane.b32.xlu0 %v1526, 32
    %v1546 = vpop.permute.xlu0 %1545
    %1547 = vrot.lane.b32.xlu0 %v1527, 32
    %v1548 = vpop.permute.xlu0 %1547
    %1549 = vrot.lane.b32.xlu0 %v1528, 32
    %v1550 = vpop.permute.xlu0 %1549
    %1551 = vrot.lane.b32.xlu0 %v1529, 32
    %v1552 = vpop.permute.xlu0 %1551
    %1553 = vrot.lane.b32.xlu0 %v1530, 32
    %v1554 = vpop.permute.xlu0 %1553
    %v1563 = vmul.f32 %v1403, %v1540
    %v1564 = vmul.f32 %v1404, %v1542
    %v1565 = vmul.f32 %v1405, %v1544
    %v1566 = vmul.f32 %v1406, %v1546
    %v1567 = vmul.f32 %v1407, %v1548
    %v1568 = vmul.f32 %v1408, %v1550
    %v1569 = vmul.f32 %v1409, %v1552
    %v1570 = vmul.f32 %v1410, %v1554
    %1579 = vrot.lane.b32.xlu0 %v1563, 64
    %v1580 = vpop.permute.xlu0 %1579
    %1581 = vrot.lane.b32.xlu0 %v1564, 64
    %v1582 = vpop.permute.xlu0 %1581
    %1583 = vrot.lane.b32.xlu0 %v1565, 64
    %v1584 = vpop.permute.xlu0 %1583
    %1585 = vrot.lane.b32.xlu0 %v1566, 64
    %v1586 = vpop.permute.xlu0 %1585
    %1587 = vrot.lane.b32.xlu0 %v1567, 64
    %v1588 = vpop.permute.xlu0 %1587
    %1589 = vrot.lane.b32.xlu0 %v1568, 64
    %v1590 = vpop.permute.xlu0 %1589
    %1591 = vrot.lane.b32.xlu0 %v1569, 64
    %v1592 = vpop.permute.xlu0 %1591
    %1593 = vrot.lane.b32.xlu0 %v1570, 64
    %v1594 = vpop.permute.xlu0 %1593
    %vm1603 = vcmask 257027
    %1604 = vst.msk [vmem:[#allocation10] sm:$0x8] %vm1603, %v1580
    %1605 = vst.msk [vmem:[#allocation10 + $0x8] sm:$0x8] %vm1603, %v1582
    %1606 = vst.msk [vmem:[#allocation10 + $0x10] sm:$0x8] %vm1603, %v1584
    %1607 = vst.msk [vmem:[#allocation10 + $0x18] sm:$0x8] %vm1603, %v1586
    %1608 = vst.msk [vmem:[#allocation10 + $0x20] sm:$0x8] %vm1603, %v1588
    %1609 = vst.msk [vmem:[#allocation10 + $0x28] sm:$0x8] %vm1603, %v1590
    %1610 = vst.msk [vmem:[#allocation10 + $0x30] sm:$0x8] %vm1603, %v1592
    %1611 = vst.msk [vmem:[#allocation10 + $0x38] sm:$0x8] %vm1603, %v1594
    %v1612 = vrot.slane %v1563, 3
    %v1613 = vrot.slane %v1564, 2
    %v1614 = vsel %vm571, %v1613, %v1612
    %v1615 = vrot.slane %v1565, 1
    %v1616 = vsel %vm574, %v1615, %v1614
    %v1617 = vsel %vm577, %v1566, %v1616
    %v1618 = vrot.slane %v1567, 7
    %v1619 = vsel %vm580, %v1618, %v1617
    %v1620 = vrot.slane %v1568, 6
    %v1621 = vsel %vm583, %v1620, %v1619
    %v1622 = vrot.slane %v1569, 5
    %v1623 = vsel %vm586, %v1622, %v1621
    %v1624 = vrot.slane %v1570, 4
    %v1625 = vsel %vm589, %v1624, %v1623
    %1626 = vrot.lane.b32.xlu0 %v1625, 64
    %v1627 = vpop.permute.xlu0 %1626
    %v1628 = vsel %vm97, %v1627, 0
    %1630 = vmatprep.subr.mxu0 0.0
    %1631 = vmatpush1.msra.mxu0 %v74
    %1632 = vmatprep.subr.mxu0 0.0
    %1633 = vmatpush1.msra.mxu0 %v75
    %1634 = vmatprep.subr.mxu0 0.0
    %1635 = vmatpush1.msra.mxu0 %v76
    %1636 = vmatprep.subr.mxu0 0.0
    %1637 = vmatpush1.msra.mxu0 %v77
    %1638 = vmatprep.subr.mxu0 0.0
    %1639 = vmatpush1.msra.mxu0 0.0
    %1640 = vmatprep.subr.mxu0 0.0
    %1641 = vmatpush1.msra.mxu0 0.0
    %1642 = vmatprep.subr.mxu0 0.0
    %1643 = vmatpush1.msra.mxu0 0.0
    %1644 = vmatprep.subr.mxu0 0.0
    %1645 = vmatpush1.msra.mxu0 0.0
    %1646 = vmatprep.subr.mxu0 0.0
    %1647 = vmatpush1.msra.mxu0 0.0
    %1648 = vmatprep.subr.mxu0 0.0
    %1649 = vmatpush1.msra.mxu0 0.0
    %1650 = vmatprep.subr.mxu0 0.0
    %1651 = vmatpush1.msra.mxu0 0.0
    %1652 = vmatprep.subr.mxu0 0.0
    %1653 = vmatpush1.msra.mxu0 0.0
    %1654 = vmatprep.subr.mxu0 0.0
    %1655 = vmatpush1.msra.mxu0 0.0
    %1656 = vmatprep.subr.mxu0 0.0
    %1657 = vmatpush1.msra.mxu0 0.0
    %1658 = vmatprep.subr.mxu0 0.0
    %1659 = vmatpush1.msra.mxu0 0.0
    %1660 = vmatprep.subr.mxu0 0.0
    %1661 = vmatpush1.msra.mxu0 0.0
    %1662 = vmatprep.subr.mxu0 0.0
    %1663 = vmatpush1.msra.mxu0 0.0
    %1664 = vmatprep.subr.mxu0 0.0
    %1665 = vmatpush1.msra.mxu0 0.0
    %1666 = vmatprep.subr.mxu0 0.0
    %1667 = vmatpush1.msra.mxu0 0.0
    %1668 = vmatprep.subr.mxu0 0.0
    %1669 = vmatpush1.msra.mxu0 0.0
    %1670 = vmatprep.subr.mxu0 0.0
    %1671 = vmatpush1.msra.mxu0 0.0
    %1672 = vmatprep.subr.mxu0 0.0
    %1673 = vmatpush1.msra.mxu0 0.0
    %1674 = vmatprep.subr.mxu0 0.0
    %1675 = vmatpush1.msra.mxu0 0.0
    %1676 = vmatprep.subr.mxu0 0.0
    %1677 = vmatpush1.msra.mxu0 0.0
    %1678 = vmatprep.subr.mxu0 0.0
    %1679 = vmatpush1.msra.mxu0 0.0
    %1680 = vmatprep.subr.mxu0 0.0
    %1681 = vmatpush1.msra.mxu0 0.0
    %1682 = vmatprep.subr.mxu0 0.0
    %1683 = vmatpush1.msra.mxu0 0.0
    %1684 = vmatprep.subr.mxu0 0.0
    %1685 = vmatpush1.msra.mxu0 0.0
    %1686 = vmatprep.subr.mxu0 0.0
    %1687 = vmatpush1.msra.mxu0 0.0
    %1688 = vmatprep.subr.mxu0 0.0
    %1689 = vmatpush1.msra.mxu0 0.0
    %1690 = vmatprep.subr.mxu0 0.0
    %1691 = vmatpush1.msra.mxu0 0.0
    %1692 = vmatprep.subr.mxu0 0.0
    %1693 = vmatpush1.msra.mxu0 0.0
    %1694 = vmatprep.mubr.f32.mxu0 0.0
    %1695 = vmatmul.mubr.f32.gmra.mrb[0].mxu0 %v1628
    %v1696 = vpop.f32.mrb[0].mxu0
    %v1697 = vadd.f32 0.0, %v1696
    %v1698 = vpop.f32.mrb[0].mxu0
    %1699 = vdwg.mxu0
    %v1701 = vrot.slane %v1697, 4
    %v1702 = vrot.slane %v1697, 5
    %v1703 = vrot.slane %v1697, 6
    %v1704 = vrot.slane %v1697, 7
    %v1705 = vrot.slane %v1697, 1
    %v1706 = vrot.slane %v1697, 2
    %v1707 = vrot.slane %v1697, 3
    %v1716 = vadd.f32 %v189, %v1701
    %v1717 = vadd.f32 %v194, %v1702
    %v1718 = vadd.f32 %v199, %v1703
    %v1719 = vadd.f32 %v204, %v1704
    %v1720 = vadd.f32 %v209, %v1697
    %v1721 = vadd.f32 %v214, %v1705
    %v1722 = vadd.f32 %v219, %v1706
    %v1723 = vadd.f32 %v224, %v1707
    %v1724 = vmul.f32 %v1716, %v230
    %v1725 = vmul.f32 %v1717, %v230
    %v1726 = vmul.f32 %v1718, %v230
    %v1727 = vmul.f32 %v1719, %v230
    %v1728 = vmul.f32 %v1720, %v230
    %v1729 = vmul.f32 %v1721, %v230
    %v1730 = vmul.f32 %v1722, %v230
    %v1731 = vmul.f32 %v1723, %v230
    %v1732 = vtanh.pop %v1724
    %v1733 = vtanh.pop %v1725
    %v1734 = vtanh.pop %v1726
    %v1735 = vtanh.pop %v1727
    %v1736 = vtanh.pop %v1728
    %v1737 = vtanh.pop %v1729
    %v1738 = vtanh.pop %v1730
    %v1739 = vtanh.pop %v1731
    %v1740 = vmul.f32 %v1732, %v230
    %v1741 = vmul.f32 %v1733, %v230
    %v1742 = vmul.f32 %v1734, %v230
    %v1743 = vmul.f32 %v1735, %v230
    %v1744 = vmul.f32 %v1736, %v230
    %v1745 = vmul.f32 %v1737, %v230
    %v1746 = vmul.f32 %v1738, %v230
    %v1747 = vmul.f32 %v1739, %v230
    %v1748 = vadd.f32 %v1740, %v231
    %v1749 = vadd.f32 %v1741, %v231
    %v1750 = vadd.f32 %v1742, %v231
    %v1751 = vadd.f32 %v1743, %v231
    %v1752 = vadd.f32 %v1744, %v231
    %v1753 = vadd.f32 %v1745, %v231
    %v1754 = vadd.f32 %v1746, %v231
    %v1755 = vadd.f32 %v1747, %v231
    %v1764 = vrot.slane %v1515, 7
    %v1765 = vrot.slane %v1516, 7
    %v1766 = vrot.slane %v1517, 7
    %v1767 = vrot.slane %v1518, 7
    %v1768 = vrot.slane %v1519, 7
    %v1769 = vrot.slane %v1520, 7
    %v1770 = vrot.slane %v1521, 7
    %v1771 = vrot.slane %v1522, 7
    %v1780 = vmul.f32 %v1748, %v1764
    %v1781 = vmul.f32 %v1749, %v1765
    %v1782 = vmul.f32 %v1750, %v1766
    %v1783 = vmul.f32 %v1751, %v1767
    %v1784 = vmul.f32 %v1752, %v1768
    %v1785 = vmul.f32 %v1753, %v1769
    %v1786 = vmul.f32 %v1754, %v1770
    %v1787 = vmul.f32 %v1755, %v1771
    %1796 = vrot.lane.b32.xlu0 %v1748, 32
    %v1797 = vpop.permute.xlu0 %1796
    %1798 = vrot.lane.b32.xlu0 %v1749, 32
    %v1799 = vpop.permute.xlu0 %1798
    %1800 = vrot.lane.b32.xlu0 %v1750, 32
    %v1801 = vpop.permute.xlu0 %1800
    %1802 = vrot.lane.b32.xlu0 %v1751, 32
    %v1803 = vpop.permute.xlu0 %1802
    %1804 = vrot.lane.b32.xlu0 %v1752, 32
    %v1805 = vpop.permute.xlu0 %1804
    %1806 = vrot.lane.b32.xlu0 %v1753, 32
    %v1807 = vpop.permute.xlu0 %1806
    %1808 = vrot.lane.b32.xlu0 %v1754, 32
    %v1809 = vpop.permute.xlu0 %1808
    %1810 = vrot.lane.b32.xlu0 %v1755, 32
    %v1811 = vpop.permute.xlu0 %1810
    %v1820 = vmul.f32 %v1748, %v1797
    %v1821 = vmul.f32 %v1749, %v1799
    %v1822 = vmul.f32 %v1750, %v1801
    %v1823 = vmul.f32 %v1751, %v1803
    %v1824 = vmul.f32 %v1752, %v1805
    %v1825 = vmul.f32 %v1753, %v1807
    %v1826 = vmul.f32 %v1754, %v1809
    %v1827 = vmul.f32 %v1755, %v1811
    %1836 = vrot.lane.b32.xlu0 %v1820, 32
    %v1837 = vpop.permute.xlu0 %1836
    %1838 = vrot.lane.b32.xlu0 %v1821, 32
    %v1839 = vpop.permute.xlu0 %1838
    %1840 = vrot.lane.b32.xlu0 %v1822, 32
    %v1841 = vpop.permute.xlu0 %1840
    %1842 = vrot.lane.b32.xlu0 %v1823, 32
    %v1843 = vpop.permute.xlu0 %1842
    %1844 = vrot.lane.b32.xlu0 %v1824, 32
    %v1845 = vpop.permute.xlu0 %1844
    %1846 = vrot.lane.b32.xlu0 %v1825, 32
    %v1847 = vpop.permute.xlu0 %1846
    %1848 = vrot.lane.b32.xlu0 %v1826, 32
    %v1849 = vpop.permute.xlu0 %1848
    %1850 = vrot.lane.b32.xlu0 %v1827, 32
    %v1851 = vpop.permute.xlu0 %1850
    %v1860 = vadd.f32 %v1780, %v1837
    %v1861 = vadd.f32 %v1781, %v1839
    %v1862 = vadd.f32 %v1782, %v1841
    %v1863 = vadd.f32 %v1783, %v1843
    %v1864 = vadd.f32 %v1784, %v1845
    %v1865 = vadd.f32 %v1785, %v1847
    %v1866 = vadd.f32 %v1786, %v1849
    %v1867 = vadd.f32 %v1787, %v1851
    %v1868 = vtanh.pop %v1860
    %v1869 = vtanh.pop %v1861
    %v1870 = vtanh.pop %v1862
    %v1871 = vtanh.pop %v1863
    %v1872 = vtanh.pop %v1864
    %v1873 = vtanh.pop %v1865
    %v1874 = vtanh.pop %v1866
    %v1875 = vtanh.pop %v1867
    %1884 = vrot.lane.b32.xlu0 %v1868, 32
    %v1885 = vpop.permute.xlu0 %1884
    %1886 = vrot.lane.b32.xlu0 %v1869, 32
    %v1887 = vpop.permute.xlu0 %1886
    %1888 = vrot.lane.b32.xlu0 %v1870, 32
    %v1889 = vpop.permute.xlu0 %1888
    %1890 = vrot.lane.b32.xlu0 %v1871, 32
    %v1891 = vpop.permute.xlu0 %1890
    %1892 = vrot.lane.b32.xlu0 %v1872, 32
    %v1893 = vpop.permute.xlu0 %1892
    %1894 = vrot.lane.b32.xlu0 %v1873, 32
    %v1895 = vpop.permute.xlu0 %1894
    %1896 = vrot.lane.b32.xlu0 %v1874, 32
    %v1897 = vpop.permute.xlu0 %1896
    %1898 = vrot.lane.b32.xlu0 %v1875, 32
    %v1899 = vpop.permute.xlu0 %1898
    %v1908 = vmul.f32 %v1748, %v1885
    %v1909 = vmul.f32 %v1749, %v1887
    %v1910 = vmul.f32 %v1750, %v1889
    %v1911 = vmul.f32 %v1751, %v1891
    %v1912 = vmul.f32 %v1752, %v1893
    %v1913 = vmul.f32 %v1753, %v1895
    %v1914 = vmul.f32 %v1754, %v1897
    %v1915 = vmul.f32 %v1755, %v1899
    %1924 = vrot.lane.b32.xlu0 %v1908, 64
    %v1925 = vpop.permute.xlu0 %1924
    %1926 = vrot.lane.b32.xlu0 %v1909, 64
    %v1927 = vpop.permute.xlu0 %1926
    %1928 = vrot.lane.b32.xlu0 %v1910, 64
    %v1929 = vpop.permute.xlu0 %1928
    %1930 = vrot.lane.b32.xlu0 %v1911, 64
    %v1931 = vpop.permute.xlu0 %1930
    %1932 = vrot.lane.b32.xlu0 %v1912, 64
    %v1933 = vpop.permute.xlu0 %1932
    %1934 = vrot.lane.b32.xlu0 %v1913, 64
    %v1935 = vpop.permute.xlu0 %1934
    %1936 = vrot.lane.b32.xlu0 %v1914, 64
    %v1937 = vpop.permute.xlu0 %1936
    %1938 = vrot.lane.b32.xlu0 %v1915, 64
    %v1939 = vpop.permute.xlu0 %1938
    %vm1948 = vcmask 258052
    %1949 = vst.msk [vmem:[#allocation10] sm:$0x10] %vm1948, %v1925
    %1950 = vst.msk [vmem:[#allocation10 + $0x8] sm:$0x10] %vm1948, %v1927
    %1951 = vst.msk [vmem:[#allocation10 + $0x10] sm:$0x10] %vm1948, %v1929
    %1952 = vst.msk [vmem:[#allocation10 + $0x18] sm:$0x10] %vm1948, %v1931
    %1953 = vst.msk [vmem:[#allocation10 + $0x20] sm:$0x10] %vm1948, %v1933
    %1954 = vst.msk [vmem:[#allocation10 + $0x28] sm:$0x10] %vm1948, %v1935
    %1955 = vst.msk [vmem:[#allocation10 + $0x30] sm:$0x10] %vm1948, %v1937
    %1956 = vst.msk [vmem:[#allocation10 + $0x38] sm:$0x10] %vm1948, %v1939
    %v1957 = vrot.slane %v1908, 4
    %v1958 = vrot.slane %v1909, 3
    %v1959 = vsel %vm571, %v1958, %v1957
    %v1960 = vrot.slane %v1910, 2
    %v1961 = vsel %vm574, %v1960, %v1959
    %v1962 = vrot.slane %v1911, 1
    %v1963 = vsel %vm577, %v1962, %v1961
    %v1964 = vsel %vm580, %v1912, %v1963
    %v1965 = vrot.slane %v1913, 7
    %v1966 = vsel %vm583, %v1965, %v1964
    %v1967 = vrot.slane %v1914, 6
    %v1968 = vsel %vm586, %v1967, %v1966
    %v1969 = vrot.slane %v1915, 5
    %v1970 = vsel %vm589, %v1969, %v1968
    %1971 = vrot.lane.b32.xlu0 %v1970, 64
    %v1972 = vpop.permute.xlu0 %1971
    %v1973 = vsel %vm97, %v1972, 0
    %1975 = vmatprep.subr.mxu0 0.0
    %1976 = vmatpush1.msra.mxu0 %v74
    %1977 = vmatprep.subr.mxu0 0.0
    %1978 = vmatpush1.msra.mxu0 %v75
    %1979 = vmatprep.subr.mxu0 0.0
    %1980 = vmatpush1.msra.mxu0 %v76
    %1981 = vmatprep.subr.mxu0 0.0
    %1982 = vmatpush1.msra.mxu0 %v77
    %1983 = vmatprep.subr.mxu0 0.0
    %1984 = vmatpush1.msra.mxu0 0.0
    %1985 = vmatprep.subr.mxu0 0.0
    %1986 = vmatpush1.msra.mxu0 0.0
    %1987 = vmatprep.subr.mxu0 0.0
    %1988 = vmatpush1.msra.mxu0 0.0
    %1989 = vmatprep.subr.mxu0 0.0
    %1990 = vmatpush1.msra.mxu0 0.0
    %1991 = vmatprep.subr.mxu0 0.0
    %1992 = vmatpush1.msra.mxu0 0.0
    %1993 = vmatprep.subr.mxu0 0.0
    %1994 = vmatpush1.msra.mxu0 0.0
    %1995 = vmatprep.subr.mxu0 0.0
    %1996 = vmatpush1.msra.mxu0 0.0
    %1997 = vmatprep.subr.mxu0 0.0
    %1998 = vmatpush1.msra.mxu0 0.0
    %1999 = vmatprep.subr.mxu0 0.0
    %2000 = vmatpush1.msra.mxu0 0.0
    %2001 = vmatprep.subr.mxu0 0.0
    %2002 = vmatpush1.msra.mxu0 0.0
    %2003 = vmatprep.subr.mxu0 0.0
    %2004 = vmatpush1.msra.mxu0 0.0
    %2005 = vmatprep.subr.mxu0 0.0
    %2006 = vmatpush1.msra.mxu0 0.0
    %2007 = vmatprep.subr.mxu0 0.0
    %2008 = vmatpush1.msra.mxu0 0.0
    %2009 = vmatprep.subr.mxu0 0.0
    %2010 = vmatpush1.msra.mxu0 0.0
    %2011 = vmatprep.subr.mxu0 0.0
    %2012 = vmatpush1.msra.mxu0 0.0
    %2013 = vmatprep.subr.mxu0 0.0
    %2014 = vmatpush1.msra.mxu0 0.0
    %2015 = vmatprep.subr.mxu0 0.0
    %2016 = vmatpush1.msra.mxu0 0.0
    %2017 = vmatprep.subr.mxu0 0.0
    %2018 = vmatpush1.msra.mxu0 0.0
    %2019 = vmatprep.subr.mxu0 0.0
    %2020 = vmatpush1.msra.mxu0 0.0
    %2021 = vmatprep.subr.mxu0 0.0
    %2022 = vmatpush1.msra.mxu0 0.0
    %2023 = vmatprep.subr.mxu0 0.0
    %2024 = vmatpush1.msra.mxu0 0.0
    %2025 = vmatprep.subr.mxu0 0.0
    %2026 = vmatpush1.msra.mxu0 0.0
    %2027 = vmatprep.subr.mxu0 0.0
    %2028 = vmatpush1.msra.mxu0 0.0
    %2029 = vmatprep.subr.mxu0 0.0
    %2030 = vmatpush1.msra.mxu0 0.0
    %2031 = vmatprep.subr.mxu0 0.0
    %2032 = vmatpush1.msra.mxu0 0.0
    %2033 = vmatprep.subr.mxu0 0.0
    %2034 = vmatpush1.msra.mxu0 0.0
    %2035 = vmatprep.subr.mxu0 0.0
    %2036 = vmatpush1.msra.mxu0 0.0
    %2037 = vmatprep.subr.mxu0 0.0
    %2038 = vmatpush1.msra.mxu0 0.0
    %2039 = vmatprep.mubr.f32.mxu0 0.0
    %2040 = vmatmul.mubr.f32.gmra.mrb[0].mxu0 %v1973
    %v2041 = vpop.f32.mrb[0].mxu0
    %v2042 = vadd.f32 0.0, %v2041
    %v2043 = vpop.f32.mrb[0].mxu0
    %2044 = vdwg.mxu0
    %v2046 = vrot.slane %v2042, 3
    %v2047 = vrot.slane %v2042, 4
    %v2048 = vrot.slane %v2042, 5
    %v2049 = vrot.slane %v2042, 6
    %v2050 = vrot.slane %v2042, 7
    %v2051 = vrot.slane %v2042, 1
    %v2052 = vrot.slane %v2042, 2
    %v2061 = vadd.f32 %v189, %v2046
    %v2062 = vadd.f32 %v194, %v2047
    %v2063 = vadd.f32 %v199, %v2048
    %v2064 = vadd.f32 %v204, %v2049
    %v2065 = vadd.f32 %v209, %v2050
    %v2066 = vadd.f32 %v214, %v2042
    %v2067 = vadd.f32 %v219, %v2051
    %v2068 = vadd.f32 %v224, %v2052
    %v2069 = vmul.f32 %v2061, %v230
    %v2070 = vmul.f32 %v2062, %v230
    %v2071 = vmul.f32 %v2063, %v230
    %v2072 = vmul.f32 %v2064, %v230
    %v2073 = vmul.f32 %v2065, %v230
    %v2074 = vmul.f32 %v2066, %v230
    %v2075 = vmul.f32 %v2067, %v230
    %v2076 = vmul.f32 %v2068, %v230
    %v2077 = vtanh.pop %v2069
    %v2078 = vtanh.pop %v2070
    %v2079 = vtanh.pop %v2071
    %v2080 = vtanh.pop %v2072
    %v2081 = vtanh.pop %v2073
    %v2082 = vtanh.pop %v2074
    %v2083 = vtanh.pop %v2075
    %v2084 = vtanh.pop %v2076
    %v2085 = vmul.f32 %v2077, %v230
    %v2086 = vmul.f32 %v2078, %v230
    %v2087 = vmul.f32 %v2079, %v230
    %v2088 = vmul.f32 %v2080, %v230
    %v2089 = vmul.f32 %v2081, %v230
    %v2090 = vmul.f32 %v2082, %v230
    %v2091 = vmul.f32 %v2083, %v230
    %v2092 = vmul.f32 %v2084, %v230
    %v2093 = vadd.f32 %v2085, %v231
    %v2094 = vadd.f32 %v2086, %v231
    %v2095 = vadd.f32 %v2087, %v231
    %v2096 = vadd.f32 %v2088, %v231
    %v2097 = vadd.f32 %v2089, %v231
    %v2098 = vadd.f32 %v2090, %v231
    %v2099 = vadd.f32 %v2091, %v231
    %v2100 = vadd.f32 %v2092, %v231
    %v2109 = vrot.slane %v1860, 7
    %v2110 = vrot.slane %v1861, 7
    %v2111 = vrot.slane %v1862, 7
    %v2112 = vrot.slane %v1863, 7
    %v2113 = vrot.slane %v1864, 7
    %v2114 = vrot.slane %v1865, 7
    %v2115 = vrot.slane %v1866, 7
    %v2116 = vrot.slane %v1867, 7
    %v2125 = vmul.f32 %v2093, %v2109
    %v2126 = vmul.f32 %v2094, %v2110
    %v2127 = vmul.f32 %v2095, %v2111
    %v2128 = vmul.f32 %v2096, %v2112
    %v2129 = vmul.f32 %v2097, %v2113
    %v2130 = vmul.f32 %v2098, %v2114
    %v2131 = vmul.f32 %v2099, %v2115
    %v2132 = vmul.f32 %v2100, %v2116
    %2141 = vrot.lane.b32.xlu0 %v2093, 32
    %v2142 = vpop.permute.xlu0 %2141
    %2143 = vrot.lane.b32.xlu0 %v2094, 32
    %v2144 = vpop.permute.xlu0 %2143
    %2145 = vrot.lane.b32.xlu0 %v2095, 32
    %v2146 = vpop.permute.xlu0 %2145
    %2147 = vrot.lane.b32.xlu0 %v2096, 32
    %v2148 = vpop.permute.xlu0 %2147
    %2149 = vrot.lane.b32.xlu0 %v2097, 32
    %v2150 = vpop.permute.xlu0 %2149
    %2151 = vrot.lane.b32.xlu0 %v2098, 32
    %v2152 = vpop.permute.xlu0 %2151
    %2153 = vrot.lane.b32.xlu0 %v2099, 32
    %v2154 = vpop.permute.xlu0 %2153
    %2155 = vrot.lane.b32.xlu0 %v2100, 32
    %v2156 = vpop.permute.xlu0 %2155
    %v2165 = vmul.f32 %v2093, %v2142
    %v2166 = vmul.f32 %v2094, %v2144
    %v2167 = vmul.f32 %v2095, %v2146
    %v2168 = vmul.f32 %v2096, %v2148
    %v2169 = vmul.f32 %v2097, %v2150
    %v2170 = vmul.f32 %v2098, %v2152
    %v2171 = vmul.f32 %v2099, %v2154
    %v2172 = vmul.f32 %v2100, %v2156
    %2181 = vrot.lane.b32.xlu0 %v2165, 32
    %v2182 = vpop.permute.xlu0 %2181
    %2183 = vrot.lane.b32.xlu0 %v2166, 32
    %v2184 = vpop.permute.xlu0 %2183
    %2185 = vrot.lane.b32.xlu0 %v2167, 32
    %v2186 = vpop.permute.xlu0 %2185
    %2187 = vrot.lane.b32.xlu0 %v2168, 32
    %v2188 = vpop.permute.xlu0 %2187
    %2189 = vrot.lane.b32.xlu0 %v2169, 32
    %v2190 = vpop.permute.xlu0 %2189
    %2191 = vrot.lane.b32.xlu0 %v2170, 32
    %v2192 = vpop.permute.xlu0 %2191
    %2193 = vrot.lane.b32.xlu0 %v2171, 32
    %v2194 = vpop.permute.xlu0 %2193
    %2195 = vrot.lane.b32.xlu0 %v2172, 32
    %v2196 = vpop.permute.xlu0 %2195
    %v2205 = vadd.f32 %v2125, %v2182
    %v2206 = vadd.f32 %v2126, %v2184
    %v2207 = vadd.f32 %v2127, %v2186
    %v2208 = vadd.f32 %v2128, %v2188
    %v2209 = vadd.f32 %v2129, %v2190
    %v2210 = vadd.f32 %v2130, %v2192
    %v2211 = vadd.f32 %v2131, %v2194
    %v2212 = vadd.f32 %v2132, %v2196
    %v2213 = vtanh.pop %v2205
    %v2214 = vtanh.pop %v2206
    %v2215 = vtanh.pop %v2207
    %v2216 = vtanh.pop %v2208
    %v2217 = vtanh.pop %v2209
    %v2218 = vtanh.pop %v2210
    %v2219 = vtanh.pop %v2211
    %v2220 = vtanh.pop %v2212
    %2229 = vrot.lane.b32.xlu0 %v2213, 32
    %v2230 = vpop.permute.xlu0 %2229
    %2231 = vrot.lane.b32.xlu0 %v2214, 32
    %v2232 = vpop.permute.xlu0 %2231
    %2233 = vrot.lane.b32.xlu0 %v2215, 32
    %v2234 = vpop.permute.xlu0 %2233
    %2235 = vrot.lane.b32.xlu0 %v2216, 32
    %v2236 = vpop.permute.xlu0 %2235
    %2237 = vrot.lane.b32.xlu0 %v2217, 32
    %v2238 = vpop.permute.xlu0 %2237
    %2239 = vrot.lane.b32.xlu0 %v2218, 32
    %v2240 = vpop.permute.xlu0 %2239
    %2241 = vrot.lane.b32.xlu0 %v2219, 32
    %v2242 = vpop.permute.xlu0 %2241
    %2243 = vrot.lane.b32.xlu0 %v2220, 32
    %v2244 = vpop.permute.xlu0 %2243
    %v2253 = vmul.f32 %v2093, %v2230
    %v2254 = vmul.f32 %v2094, %v2232
    %v2255 = vmul.f32 %v2095, %v2234
    %v2256 = vmul.f32 %v2096, %v2236
    %v2257 = vmul.f32 %v2097, %v2238
    %v2258 = vmul.f32 %v2098, %v2240
    %v2259 = vmul.f32 %v2099, %v2242
    %v2260 = vmul.f32 %v2100, %v2244
    %2269 = vrot.lane.b32.xlu0 %v2253, 64
    %v2270 = vpop.permute.xlu0 %2269
    %2271 = vrot.lane.b32.xlu0 %v2254, 64
    %v2272 = vpop.permute.xlu0 %2271
    %2273 = vrot.lane.b32.xlu0 %v2255, 64
    %v2274 = vpop.permute.xlu0 %2273
    %2275 = vrot.lane.b32.xlu0 %v2256, 64
    %v2276 = vpop.permute.xlu0 %2275
    %2277 = vrot.lane.b32.xlu0 %v2257, 64
    %v2278 = vpop.permute.xlu0 %2277
    %2279 = vrot.lane.b32.xlu0 %v2258, 64
    %v2280 = vpop.permute.xlu0 %2279
    %2281 = vrot.lane.b32.xlu0 %v2259, 64
    %v2282 = vpop.permute.xlu0 %2281
    %2283 = vrot.lane.b32.xlu0 %v2260, 64
    %v2284 = vpop.permute.xlu0 %2283
    %vm2293 = vcmask 259077
    %2294 = vst.msk [vmem:[#allocation10] sm:$0x20] %vm2293, %v2270
    %2295 = vst.msk [vmem:[#allocation10 + $0x8] sm:$0x20] %vm2293, %v2272
    %2296 = vst.msk [vmem:[#allocation10 + $0x10] sm:$0x20] %vm2293, %v2274
    %2297 = vst.msk [vmem:[#allocation10 + $0x18] sm:$0x20] %vm2293, %v2276
    %2298 = vst.msk [vmem:[#allocation10 + $0x20] sm:$0x20] %vm2293, %v2278
    %2299 = vst.msk [vmem:[#allocation10 + $0x28] sm:$0x20] %vm2293, %v2280
    %2300 = vst.msk [vmem:[#allocation10 + $0x30] sm:$0x20] %vm2293, %v2282
    %2301 = vst.msk [vmem:[#allocation10 + $0x38] sm:$0x20] %vm2293, %v2284
    %v2302 = vrot.slane %v2253, 5
    %v2303 = vrot.slane %v2254, 4
    %v2304 = vsel %vm571, %v2303, %v2302
    %v2305 = vrot.slane %v2255, 3
    %v2306 = vsel %vm574, %v2305, %v2304
    %v2307 = vrot.slane %v2256, 2
    %v2308 = vsel %vm577, %v2307, %v2306
    %v2309 = vrot.slane %v2257, 1
    %v2310 = vsel %vm580, %v2309, %v2308
    %v2311 = vsel %vm583, %v2258, %v2310
    %v2312 = vrot.slane %v2259, 7
    %v2313 = vsel %vm586, %v2312, %v2311
    %v2314 = vrot.slane %v2260, 6
    %v2315 = vsel %vm589, %v2314, %v2313
    %2316 = vrot.lane.b32.xlu0 %v2315, 64
    %v2317 = vpop.permute.xlu0 %2316
    %v2318 = vsel %vm97, %v2317, 0
    %2320 = vmatprep.subr.mxu0 0.0
    %2321 = vmatpush1.msra.mxu0 %v74
    %2322 = vmatprep.subr.mxu0 0.0
    %2323 = vmatpush1.msra.mxu0 %v75
    %2324 = vmatprep.subr.mxu0 0.0
    %2325 = vmatpush1.msra.mxu0 %v76
    %2326 = vmatprep.subr.mxu0 0.0
    %2327 = vmatpush1.msra.mxu0 %v77
    %2328 = vmatprep.subr.mxu0 0.0
    %2329 = vmatpush1.msra.mxu0 0.0
    %2330 = vmatprep.subr.mxu0 0.0
    %2331 = vmatpush1.msra.mxu0 0.0
    %2332 = vmatprep.subr.mxu0 0.0
    %2333 = vmatpush1.msra.mxu0 0.0
    %2334 = vmatprep.subr.mxu0 0.0
    %2335 = vmatpush1.msra.mxu0 0.0
    %2336 = vmatprep.subr.mxu0 0.0
    %2337 = vmatpush1.msra.mxu0 0.0
    %2338 = vmatprep.subr.mxu0 0.0
    %2339 = vmatpush1.msra.mxu0 0.0
    %2340 = vmatprep.subr.mxu0 0.0
    %2341 = vmatpush1.msra.mxu0 0.0
    %2342 = vmatprep.subr.mxu0 0.0
    %2343 = vmatpush1.msra.mxu0 0.0
    %2344 = vmatprep.subr.mxu0 0.0
    %2345 = vmatpush1.msra.mxu0 0.0
    %2346 = vmatprep.subr.mxu0 0.0
    %2347 = vmatpush1.msra.mxu0 0.0
    %2348 = vmatprep.subr.mxu0 0.0
    %2349 = vmatpush1.msra.mxu0 0.0
    %2350 = vmatprep.subr.mxu0 0.0
    %2351 = vmatpush1.msra.mxu0 0.0
    %2352 = vmatprep.subr.mxu0 0.0
    %2353 = vmatpush1.msra.mxu0 0.0
    %2354 = vmatprep.subr.mxu0 0.0
    %2355 = vmatpush1.msra.mxu0 0.0
    %2356 = vmatprep.subr.mxu0 0.0
    %2357 = vmatpush1.msra.mxu0 0.0
    %2358 = vmatprep.subr.mxu0 0.0
    %2359 = vmatpush1.msra.mxu0 0.0
    %2360 = vmatprep.subr.mxu0 0.0
    %2361 = vmatpush1.msra.mxu0 0.0
    %2362 = vmatprep.subr.mxu0 0.0
    %2363 = vmatpush1.msra.mxu0 0.0
    %2364 = vmatprep.subr.mxu0 0.0
    %2365 = vmatpush1.msra.mxu0 0.0
    %2366 = vmatprep.subr.mxu0 0.0
    %2367 = vmatpush1.msra.mxu0 0.0
    %2368 = vmatprep.subr.mxu0 0.0
    %2369 = vmatpush1.msra.mxu0 0.0
    %2370 = vmatprep.subr.mxu0 0.0
    %2371 = vmatpush1.msra.mxu0 0.0
    %2372 = vmatprep.subr.mxu0 0.0
    %2373 = vmatpush1.msra.mxu0 0.0
    %2374 = vmatprep.subr.mxu0 0.0
    %2375 = vmatpush1.msra.mxu0 0.0
    %2376 = vmatprep.subr.mxu0 0.0
    %2377 = vmatpush1.msra.mxu0 0.0
    %2378 = vmatprep.subr.mxu0 0.0
    %2379 = vmatpush1.msra.mxu0 0.0
    %2380 = vmatprep.subr.mxu0 0.0
    %2381 = vmatpush1.msra.mxu0 0.0
    %2382 = vmatprep.subr.mxu0 0.0
    %2383 = vmatpush1.msra.mxu0 0.0
    %2384 = vmatprep.mubr.f32.mxu0 0.0
    %2385 = vmatmul.mubr.f32.gmra.mrb[0].mxu0 %v2318
    %v2386 = vpop.f32.mrb[0].mxu0
    %v2387 = vadd.f32 0.0, %v2386
    %v2388 = vpop.f32.mrb[0].mxu0
    %2389 = vdwg.mxu0
    %v2391 = vrot.slane %v2387, 2
    %v2392 = vrot.slane %v2387, 3
    %v2393 = vrot.slane %v2387, 4
    %v2394 = vrot.slane %v2387, 5
    %v2395 = vrot.slane %v2387, 6
    %v2396 = vrot.slane %v2387, 7
    %v2397 = vrot.slane %v2387, 1
    %v2406 = vadd.f32 %v189, %v2391
    %v2407 = vadd.f32 %v194, %v2392
    %v2408 = vadd.f32 %v199, %v2393
    %v2409 = vadd.f32 %v204, %v2394
    %v2410 = vadd.f32 %v209, %v2395
    %v2411 = vadd.f32 %v214, %v2396
    %v2412 = vadd.f32 %v219, %v2387
    %v2413 = vadd.f32 %v224, %v2397
    %v2414 = vmul.f32 %v2406, %v230
    %v2415 = vmul.f32 %v2407, %v230
    %v2416 = vmul.f32 %v2408, %v230
    %v2417 = vmul.f32 %v2409, %v230
    %v2418 = vmul.f32 %v2410, %v230
    %v2419 = vmul.f32 %v2411, %v230
    %v2420 = vmul.f32 %v2412, %v230
    %v2421 = vmul.f32 %v2413, %v230
    %v2422 = vtanh.pop %v2414
    %v2423 = vtanh.pop %v2415
    %v2424 = vtanh.pop %v2416
    %v2425 = vtanh.pop %v2417
    %v2426 = vtanh.pop %v2418
    %v2427 = vtanh.pop %v2419
    %v2428 = vtanh.pop %v2420
    %v2429 = vtanh.pop %v2421
    %v2430 = vmul.f32 %v2422, %v230
    %v2431 = vmul.f32 %v2423, %v230
    %v2432 = vmul.f32 %v2424, %v230
    %v2433 = vmul.f32 %v2425, %v230
    %v2434 = vmul.f32 %v2426, %v230
    %v2435 = vmul.f32 %v2427, %v230
    %v2436 = vmul.f32 %v2428, %v230
    %v2437 = vmul.f32 %v2429, %v230
    %v2438 = vadd.f32 %v2430, %v231
    %v2439 = vadd.f32 %v2431, %v231
    %v2440 = vadd.f32 %v2432, %v231
    %v2441 = vadd.f32 %v2433, %v231
    %v2442 = vadd.f32 %v2434, %v231
    %v2443 = vadd.f32 %v2435, %v231
    %v2444 = vadd.f32 %v2436, %v231
    %v2445 = vadd.f32 %v2437, %v231
    %v2454 = vrot.slane %v2205, 7
    %v2455 = vrot.slane %v2206, 7
    %v2456 = vrot.slane %v2207, 7
    %v2457 = vrot.slane %v2208, 7
    %v2458 = vrot.slane %v2209, 7
    %v2459 = vrot.slane %v2210, 7
    %v2460 = vrot.slane %v2211, 7
    %v2461 = vrot.slane %v2212, 7
    %v2470 = vmul.f32 %v2438, %v2454
    %v2471 = vmul.f32 %v2439, %v2455
    %v2472 = vmul.f32 %v2440, %v2456
    %v2473 = vmul.f32 %v2441, %v2457
    %v2474 = vmul.f32 %v2442, %v2458
    %v2475 = vmul.f32 %v2443, %v2459
    %v2476 = vmul.f32 %v2444, %v2460
    %v2477 = vmul.f32 %v2445, %v2461
    %2486 = vrot.lane.b32.xlu0 %v2438, 32
    %v2487 = vpop.permute.xlu0 %2486
    %2488 = vrot.lane.b32.xlu0 %v2439, 32
    %v2489 = vpop.permute.xlu0 %2488
    %2490 = vrot.lane.b32.xlu0 %v2440, 32
    %v2491 = vpop.permute.xlu0 %2490
    %2492 = vrot.lane.b32.xlu0 %v2441, 32
    %v2493 = vpop.permute.xlu0 %2492
    %2494 = vrot.lane.b32.xlu0 %v2442, 32
    %v2495 = vpop.permute.xlu0 %2494
    %2496 = vrot.lane.b32.xlu0 %v2443, 32
    %v2497 = vpop.permute.xlu0 %2496
    %2498 = vrot.lane.b32.xlu0 %v2444, 32
    %v2499 = vpop.permute.xlu0 %2498
    %2500 = vrot.lane.b32.xlu0 %v2445, 32
    %v2501 = vpop.permute.xlu0 %2500
    %v2510 = vmul.f32 %v2438, %v2487
    %v2511 = vmul.f32 %v2439, %v2489
    %v2512 = vmul.f32 %v2440, %v2491
    %v2513 = vmul.f32 %v2441, %v2493
    %v2514 = vmul.f32 %v2442, %v2495
    %v2515 = vmul.f32 %v2443, %v2497
    %v2516 = vmul.f32 %v2444, %v2499
    %v2517 = vmul.f32 %v2445, %v2501
    %2526 = vrot.lane.b32.xlu0 %v2510, 32
    %v2527 = vpop.permute.xlu0 %2526
    %2528 = vrot.lane.b32.xlu0 %v2511, 32
    %v2529 = vpop.permute.xlu0 %2528
    %2530 = vrot.lane.b32.xlu0 %v2512, 32
    %v2531 = vpop.permute.xlu0 %2530
    %2532 = vrot.lane.b32.xlu0 %v2513, 32
    %v2533 = vpop.permute.xlu0 %2532
    %2534 = vrot.lane.b32.xlu0 %v2514, 32
    %v2535 = vpop.permute.xlu0 %2534
    %2536 = vrot.lane.b32.xlu0 %v2515, 32
    %v2537 = vpop.permute.xlu0 %2536
    %2538 = vrot.lane.b32.xlu0 %v2516, 32
    %v2539 = vpop.permute.xlu0 %2538
    %2540 = vrot.lane.b32.xlu0 %v2517, 32
    %v2541 = vpop.permute.xlu0 %2540
    %v2550 = vadd.f32 %v2470, %v2527
    %v2551 = vadd.f32 %v2471, %v2529
    %v2552 = vadd.f32 %v2472, %v2531
    %v2553 = vadd.f32 %v2473, %v2533
    %v2554 = vadd.f32 %v2474, %v2535
    %v2555 = vadd.f32 %v2475, %v2537
    %v2556 = vadd.f32 %v2476, %v2539
    %v2557 = vadd.f32 %v2477, %v2541
    %v2558 = vtanh.pop %v2550
    %v2559 = vtanh.pop %v2551
    %v2560 = vtanh.pop %v2552
    %v2561 = vtanh.pop %v2553
    %v2562 = vtanh.pop %v2554
    %v2563 = vtanh.pop %v2555
    %v2564 = vtanh.pop %v2556
    %v2565 = vtanh.pop %v2557
    %2574 = vrot.lane.b32.xlu0 %v2558, 32
    %v2575 = vpop.permute.xlu0 %2574
    %2576 = vrot.lane.b32.xlu0 %v2559, 32
    %v2577 = vpop.permute.xlu0 %2576
    %2578 = vrot.lane.b32.xlu0 %v2560, 32
    %v2579 = vpop.permute.xlu0 %2578
    %2580 = vrot.lane.b32.xlu0 %v2561, 32
    %v2581 = vpop.permute.xlu0 %2580
    %2582 = vrot.lane.b32.xlu0 %v2562, 32
    %v2583 = vpop.permute.xlu0 %2582
    %2584 = vrot.lane.b32.xlu0 %v2563, 32
    %v2585 = vpop.permute.xlu0 %2584
    %2586 = vrot.lane.b32.xlu0 %v2564, 32
    %v2587 = vpop.permute.xlu0 %2586
    %2588 = vrot.lane.b32.xlu0 %v2565, 32
    %v2589 = vpop.permute.xlu0 %2588
    %v2598 = vmul.f32 %v2438, %v2575
    %v2599 = vmul.f32 %v2439, %v2577
    %v2600 = vmul.f32 %v2440, %v2579
    %v2601 = vmul.f32 %v2441, %v2581
    %v2602 = vmul.f32 %v2442, %v2583
    %v2603 = vmul.f32 %v2443, %v2585
    %v2604 = vmul.f32 %v2444, %v2587
    %v2605 = vmul.f32 %v2445, %v2589
    %2614 = vrot.lane.b32.xlu0 %v2598, 64
    %v2615 = vpop.permute.xlu0 %2614
    %2616 = vrot.lane.b32.xlu0 %v2599, 64
    %v2617 = vpop.permute.xlu0 %2616
    %2618 = vrot.lane.b32.xlu0 %v2600, 64
    %v2619 = vpop.permute.xlu0 %2618
    %2620 = vrot.lane.b32.xlu0 %v2601, 64
    %v2621 = vpop.permute.xlu0 %2620
    %2622 = vrot.lane.b32.xlu0 %v2602, 64
    %v2623 = vpop.permute.xlu0 %2622
    %2624 = vrot.lane.b32.xlu0 %v2603, 64
    %v2625 = vpop.permute.xlu0 %2624
    %2626 = vrot.lane.b32.xlu0 %v2604, 64
    %v2627 = vpop.permute.xlu0 %2626
    %2628 = vrot.lane.b32.xlu0 %v2605, 64
    %v2629 = vpop.permute.xlu0 %2628
    %vm2638 = vcmask 260102
    %2639 = vst.msk [vmem:[#allocation10] sm:$0x40] %vm2638, %v2615
    %2640 = vst.msk [vmem:[#allocation10 + $0x8] sm:$0x40] %vm2638, %v2617
    %2641 = vst.msk [vmem:[#allocation10 + $0x10] sm:$0x40] %vm2638, %v2619
    %2642 = vst.msk [vmem:[#allocation10 + $0x18] sm:$0x40] %vm2638, %v2621
    %2643 = vst.msk [vmem:[#allocation10 + $0x20] sm:$0x40] %vm2638, %v2623
    %2644 = vst.msk [vmem:[#allocation10 + $0x28] sm:$0x40] %vm2638, %v2625
    %2645 = vst.msk [vmem:[#allocation10 + $0x30] sm:$0x40] %vm2638, %v2627
    %2646 = vst.msk [vmem:[#allocation10 + $0x38] sm:$0x40] %vm2638, %v2629
    %v2647 = vrot.slane %v2598, 6
    %v2648 = vrot.slane %v2599, 5
    %v2649 = vsel %vm571, %v2648, %v2647
    %v2650 = vrot.slane %v2600, 4
    %v2651 = vsel %vm574, %v2650, %v2649
    %v2652 = vrot.slane %v2601, 3
    %v2653 = vsel %vm577, %v2652, %v2651
    %v2654 = vrot.slane %v2602, 2
    %v2655 = vsel %vm580, %v2654, %v2653
    %v2656 = vrot.slane %v2603, 1
    %v2657 = vsel %vm583, %v2656, %v2655
    %v2658 = vsel %vm586, %v2604, %v2657
    %v2659 = vrot.slane %v2605, 7
    %v2660 = vsel %vm589, %v2659, %v2658
    %2661 = vrot.lane.b32.xlu0 %v2660, 64
    %v2662 = vpop.permute.xlu0 %2661
    %v2663 = vsel %vm97, %v2662, 0
    %2665 = vmatprep.subr.mxu0 0.0
    %2666 = vmatpush1.msra.mxu0 %v74
    %2667 = vmatprep.subr.mxu0 0.0
    %2668 = vmatpush1.msra.mxu0 %v75
    %2669 = vmatprep.subr.mxu0 0.0
    %2670 = vmatpush1.msra.mxu0 %v76
    %2671 = vmatprep.subr.mxu0 0.0
    %2672 = vmatpush1.msra.mxu0 %v77
    %2673 = vmatprep.subr.mxu0 0.0
    %2674 = vmatpush1.msra.mxu0 0.0
    %2675 = vmatprep.subr.mxu0 0.0
    %2676 = vmatpush1.msra.mxu0 0.0
    %2677 = vmatprep.subr.mxu0 0.0
    %2678 = vmatpush1.msra.mxu0 0.0
    %2679 = vmatprep.subr.mxu0 0.0
    %2680 = vmatpush1.msra.mxu0 0.0
    %2681 = vmatprep.subr.mxu0 0.0
    %2682 = vmatpush1.msra.mxu0 0.0
    %2683 = vmatprep.subr.mxu0 0.0
    %2684 = vmatpush1.msra.mxu0 0.0
    %2685 = vmatprep.subr.mxu0 0.0
    %2686 = vmatpush1.msra.mxu0 0.0
    %2687 = vmatprep.subr.mxu0 0.0
    %2688 = vmatpush1.msra.mxu0 0.0
    %2689 = vmatprep.subr.mxu0 0.0
    %2690 = vmatpush1.msra.mxu0 0.0
    %2691 = vmatprep.subr.mxu0 0.0
    %2692 = vmatpush1.msra.mxu0 0.0
    %2693 = vmatprep.subr.mxu0 0.0
    %2694 = vmatpush1.msra.mxu0 0.0
    %2695 = vmatprep.subr.mxu0 0.0
    %2696 = vmatpush1.msra.mxu0 0.0
    %2697 = vmatprep.subr.mxu0 0.0
    %2698 = vmatpush1.msra.mxu0 0.0
    %2699 = vmatprep.subr.mxu0 0.0
    %2700 = vmatpush1.msra.mxu0 0.0
    %2701 = vmatprep.subr.mxu0 0.0
    %2702 = vmatpush1.msra.mxu0 0.0
    %2703 = vmatprep.subr.mxu0 0.0
    %2704 = vmatpush1.msra.mxu0 0.0
    %2705 = vmatprep.subr.mxu0 0.0
    %2706 = vmatpush1.msra.mxu0 0.0
    %2707 = vmatprep.subr.mxu0 0.0
    %2708 = vmatpush1.msra.mxu0 0.0
    %2709 = vmatprep.subr.mxu0 0.0
    %2710 = vmatpush1.msra.mxu0 0.0
    %2711 = vmatprep.subr.mxu0 0.0
    %2712 = vmatpush1.msra.mxu0 0.0
    %2713 = vmatprep.subr.mxu0 0.0
    %2714 = vmatpush1.msra.mxu0 0.0
    %2715 = vmatprep.subr.mxu0 0.0
    %2716 = vmatpush1.msra.mxu0 0.0
    %2717 = vmatprep.subr.mxu0 0.0
    %2718 = vmatpush1.msra.mxu0 0.0
    %2719 = vmatprep.subr.mxu0 0.0
    %2720 = vmatpush1.msra.mxu0 0.0
    %2721 = vmatprep.subr.mxu0 0.0
    %2722 = vmatpush1.msra.mxu0 0.0
    %2723 = vmatprep.subr.mxu0 0.0
    %2724 = vmatpush1.msra.mxu0 0.0
    %2725 = vmatprep.subr.mxu0 0.0
    %2726 = vmatpush1.msra.mxu0 0.0
    %2727 = vmatprep.subr.mxu0 0.0
    %2728 = vmatpush1.msra.mxu0 0.0
    %2729 = vmatprep.mubr.f32.mxu0 0.0
    %2730 = vmatmul.mubr.f32.gmra.mrb[0].mxu0 %v2663
    %v2731 = vpop.f32.mrb[0].mxu0
    %v2732 = vadd.f32 0.0, %v2731
    %v2733 = vpop.f32.mrb[0].mxu0
    %2734 = vdwg.mxu0
    %v2736 = vrot.slane %v2732, 1
    %v2737 = vrot.slane %v2732, 2
    %v2738 = vrot.slane %v2732, 3
    %v2739 = vrot.slane %v2732, 4
    %v2740 = vrot.slane %v2732, 5
    %v2741 = vrot.slane %v2732, 6
    %v2742 = vrot.slane %v2732, 7
    %v2751 = vadd.f32 %v189, %v2736
    %v2752 = vadd.f32 %v194, %v2737
    %v2753 = vadd.f32 %v199, %v2738
    %v2754 = vadd.f32 %v204, %v2739
    %v2755 = vadd.f32 %v209, %v2740
    %v2756 = vadd.f32 %v214, %v2741
    %v2757 = vadd.f32 %v219, %v2742
    %v2758 = vadd.f32 %v224, %v2732
    %v2759 = vmul.f32 %v2751, %v230
    %v2760 = vmul.f32 %v2752, %v230
    %v2761 = vmul.f32 %v2753, %v230
    %v2762 = vmul.f32 %v2754, %v230
    %v2763 = vmul.f32 %v2755, %v230
    %v2764 = vmul.f32 %v2756, %v230
    %v2765 = vmul.f32 %v2757, %v230
    %v2766 = vmul.f32 %v2758, %v230
    %v2767 = vtanh.pop %v2759
    %v2768 = vtanh.pop %v2760
    %v2769 = vtanh.pop %v2761
    %v2770 = vtanh.pop %v2762
    %v2771 = vtanh.pop %v2763
    %v2772 = vtanh.pop %v2764
    %v2773 = vtanh.pop %v2765
    %v2774 = vtanh.pop %v2766
    %v2775 = vmul.f32 %v2767, %v230
    %v2776 = vmul.f32 %v2768, %v230
    %v2777 = vmul.f32 %v2769, %v230
    %v2778 = vmul.f32 %v2770, %v230
    %v2779 = vmul.f32 %v2771, %v230
    %v2780 = vmul.f32 %v2772, %v230
    %v2781 = vmul.f32 %v2773, %v230
    %v2782 = vmul.f32 %v2774, %v230
    %v2783 = vadd.f32 %v2775, %v231
    %v2784 = vadd.f32 %v2776, %v231
    %v2785 = vadd.f32 %v2777, %v231
    %v2786 = vadd.f32 %v2778, %v231
    %v2787 = vadd.f32 %v2779, %v231
    %v2788 = vadd.f32 %v2780, %v231
    %v2789 = vadd.f32 %v2781, %v231
    %v2790 = vadd.f32 %v2782, %v231
    %v2799 = vrot.slane %v2550, 7
    %v2800 = vrot.slane %v2551, 7
    %v2801 = vrot.slane %v2552, 7
    %v2802 = vrot.slane %v2553, 7
    %v2803 = vrot.slane %v2554, 7
    %v2804 = vrot.slane %v2555, 7
    %v2805 = vrot.slane %v2556, 7
    %v2806 = vrot.slane %v2557, 7
    %v2815 = vmul.f32 %v2783, %v2799
    %v2816 = vmul.f32 %v2784, %v2800
    %v2817 = vmul.f32 %v2785, %v2801
    %v2818 = vmul.f32 %v2786, %v2802
    %v2819 = vmul.f32 %v2787, %v2803
    %v2820 = vmul.f32 %v2788, %v2804
    %v2821 = vmul.f32 %v2789, %v2805
    %v2822 = vmul.f32 %v2790, %v2806
    %2831 = vrot.lane.b32.xlu0 %v2783, 32
    %v2832 = vpop.permute.xlu0 %2831
    %2833 = vrot.lane.b32.xlu0 %v2784, 32
    %v2834 = vpop.permute.xlu0 %2833
    %2835 = vrot.lane.b32.xlu0 %v2785, 32
    %v2836 = vpop.permute.xlu0 %2835
    %2837 = vrot.lane.b32.xlu0 %v2786, 32
    %v2838 = vpop.permute.xlu0 %2837
    %2839 = vrot.lane.b32.xlu0 %v2787, 32
    %v2840 = vpop.permute.xlu0 %2839
    %2841 = vrot.lane.b32.xlu0 %v2788, 32
    %v2842 = vpop.permute.xlu0 %2841
    %2843 = vrot.lane.b32.xlu0 %v2789, 32
    %v2844 = vpop.permute.xlu0 %2843
    %2845 = vrot.lane.b32.xlu0 %v2790, 32
    %v2846 = vpop.permute.xlu0 %2845
    %v2855 = vmul.f32 %v2783, %v2832
    %v2856 = vmul.f32 %v2784, %v2834
    %v2857 = vmul.f32 %v2785, %v2836
    %v2858 = vmul.f32 %v2786, %v2838
    %v2859 = vmul.f32 %v2787, %v2840
    %v2860 = vmul.f32 %v2788, %v2842
    %v2861 = vmul.f32 %v2789, %v2844
    %v2862 = vmul.f32 %v2790, %v2846
    %2871 = vrot.lane.b32.xlu0 %v2855, 32
    %v2872 = vpop.permute.xlu0 %2871
    %2873 = vrot.lane.b32.xlu0 %v2856, 32
    %v2874 = vpop.permute.xlu0 %2873
    %2875 = vrot.lane.b32.xlu0 %v2857, 32
    %v2876 = vpop.permute.xlu0 %2875
    %2877 = vrot.lane.b32.xlu0 %v2858, 32
    %v2878 = vpop.permute.xlu0 %2877
    %2879 = vrot.lane.b32.xlu0 %v2859, 32
    %v2880 = vpop.permute.xlu0 %2879
    %2881 = vrot.lane.b32.xlu0 %v2860, 32
    %v2882 = vpop.permute.xlu0 %2881
    %2883 = vrot.lane.b32.xlu0 %v2861, 32
    %v2884 = vpop.permute.xlu0 %2883
    %2885 = vrot.lane.b32.xlu0 %v2862, 32
    %v2886 = vpop.permute.xlu0 %2885
    %v2895 = vadd.f32 %v2815, %v2872
    %v2896 = vadd.f32 %v2816, %v2874
    %v2897 = vadd.f32 %v2817, %v2876
    %v2898 = vadd.f32 %v2818, %v2878
    %v2899 = vadd.f32 %v2819, %v2880
    %v2900 = vadd.f32 %v2820, %v2882
    %v2901 = vadd.f32 %v2821, %v2884
    %v2902 = vadd.f32 %v2822, %v2886
    %v2903 = vtanh.pop %v2895
    %v2904 = vtanh.pop %v2896
    %v2905 = vtanh.pop %v2897
    %v2906 = vtanh.pop %v2898
    %v2907 = vtanh.pop %v2899
    %v2908 = vtanh.pop %v2900
    %v2909 = vtanh.pop %v2901
    %v2910 = vtanh.pop %v2902
    %2919 = vrot.lane.b32.xlu0 %v2903, 32
    %v2920 = vpop.permute.xlu0 %2919
    %2921 = vrot.lane.b32.xlu0 %v2904, 32
    %v2922 = vpop.permute.xlu0 %2921
    %2923 = vrot.lane.b32.xlu0 %v2905, 32
    %v2924 = vpop.permute.xlu0 %2923
    %2925 = vrot.lane.b32.xlu0 %v2906, 32
    %v2926 = vpop.permute.xlu0 %2925
    %2927 = vrot.lane.b32.xlu0 %v2907, 32
    %v2928 = vpop.permute.xlu0 %2927
    %2929 = vrot.lane.b32.xlu0 %v2908, 32
    %v2930 = vpop.permute.xlu0 %2929
    %2931 = vrot.lane.b32.xlu0 %v2909, 32
    %v2932 = vpop.permute.xlu0 %2931
    %2933 = vrot.lane.b32.xlu0 %v2910, 32
    %v2934 = vpop.permute.xlu0 %2933
    %v2943 = vmul.f32 %v2783, %v2920
    %v2944 = vmul.f32 %v2784, %v2922
    %v2945 = vmul.f32 %v2785, %v2924
    %v2946 = vmul.f32 %v2786, %v2926
    %v2947 = vmul.f32 %v2787, %v2928
    %v2948 = vmul.f32 %v2788, %v2930
    %v2949 = vmul.f32 %v2789, %v2932
    %v2950 = vmul.f32 %v2790, %v2934
    %2959 = vrot.lane.b32.xlu0 %v2943, 64
    %v2960 = vpop.permute.xlu0 %2959
    %2961 = vrot.lane.b32.xlu0 %v2944, 64
    %v2962 = vpop.permute.xlu0 %2961
    %2963 = vrot.lane.b32.xlu0 %v2945, 64
    %v2964 = vpop.permute.xlu0 %2963
    %2965 = vrot.lane.b32.xlu0 %v2946, 64
    %v2966 = vpop.permute.xlu0 %2965
    %2967 = vrot.lane.b32.xlu0 %v2947, 64
    %v2968 = vpop.permute.xlu0 %2967
    %2969 = vrot.lane.b32.xlu0 %v2948, 64
    %v2970 = vpop.permute.xlu0 %2969
    %2971 = vrot.lane.b32.xlu0 %v2949, 64
    %v2972 = vpop.permute.xlu0 %2971
    %2973 = vrot.lane.b32.xlu0 %v2950, 64
    %v2974 = vpop.permute.xlu0 %2973
    %vm2983 = vcmask 261127
    %2984 = vst.msk [vmem:[#allocation10] sm:$0x80] %vm2983, %v2960
    %2985 = vst.msk [vmem:[#allocation10 + $0x8] sm:$0x80] %vm2983, %v2962
    %2986 = vst.msk [vmem:[#allocation10 + $0x10] sm:$0x80] %vm2983, %v2964
    %2987 = vst.msk [vmem:[#allocation10 + $0x18] sm:$0x80] %vm2983, %v2966
    %2988 = vst.msk [vmem:[#allocation10 + $0x20] sm:$0x80] %vm2983, %v2968
    %2989 = vst.msk [vmem:[#allocation10 + $0x28] sm:$0x80] %vm2983, %v2970
    %2990 = vst.msk [vmem:[#allocation10 + $0x30] sm:$0x80] %vm2983, %v2972
    %2991 = vst.msk [vmem:[#allocation10 + $0x38] sm:$0x80] %vm2983, %v2974
    // Predicated region
    $region38: #{lstm_atten_layer.1} parent=1 // pred_check
      _
    $region39: #{lstm_atten_layer.1} parent=1 // pred_check_branch
      %2993 = sbr.rel (0) target = $region41
    $region40: #{lstm_atten_layer.1} parent=1 // pred_region
      %s2995 = ssub.s32 1024, 1024
      %2996 = vsyncadd [#allocation4], %s2995
      %s2997 = sshll.u32 [#allocation10], 4
      %s2998 = int_to_ptr.vmem [resolvable:$true] %s2997
      %3003 = dma.vmem_to_hbm [thread:$0]  %s2998, 1024, %s5, [#allocation4], 128, 128, 8
    $region41: #{lstm_atten_layer.1} parent=1 // pred_fallthru
      _
    // Predicated region
    $region42: #{lstm_atten_layer.1} parent=1 // pred_check
      _
    $region43: #{lstm_atten_layer.1} parent=1 // pred_check_branch
      %3005 = sbr.rel (0) target = $region45
    $region44: #{lstm_atten_layer.1} parent=1 // pred_region
      %3006 = dma.done [#allocation4], 1024
    $region45: #{lstm_atten_layer.1} parent=1 // pred_fallthru
      _
    %3007 = vsyncpa [#allocation3], 1
    %3008 = vsyncpa [#allocation6], 1
    %3009 = vsyncpa [#allocation9], 1
    %3010 = vsyncpa [#allocation4], 1

</llo_original>
